<compile_context>
chip_gen: v5e
topology: v5e:2x2
jax: 0.10.0
libtpu: 0.0.40
codegen_flags: <defaults>
</compile_context>

<pallas_src>
import functools

import jax
import jax.numpy as jnp
from jax.experimental import pallas as pl
from jax.experimental.pallas import tpu as pltpu

EPS = 1e-5  # torch.nn.BatchNorm2d default eps


# ----------------------------- Pallas kernel -------------------------------

def _bn_relu(y, gt, gb, inv_n):
    """Training-mode BatchNorm2d + ReLU on a (B, C*HW) activation slab.

    gt : (C, C*HW) 0/1 expansion matrix (row c is 1 over channel c's HW cols).
    gb : (2, C)   stacked [gamma; beta].
    """
    # Single pass over y: per-column sum and sum-of-squares, stacked (2, C*HW).
    stats = jnp.concatenate(
        [jnp.sum(y, axis=0, keepdims=True),
         jnp.sum(y * y, axis=0, keepdims=True)], axis=0)
    # ONE MXU pass reduces columns -> channels (contract gt's last dim: A@B^T).
    cstats = jax.lax.dot_general(
        stats, gt, (((1,), (1,)), ((), ())),
        preferred_element_type=jnp.float32)                           # (2, C)
    mean = cstats[0:1] * inv_n
    # biased variance (torch BN); clamp against E[x^2]-mean^2 cancellation
    var = jnp.maximum(cstats[1:2] * inv_n - mean * mean, 0.0)
    scale = gb[0:1] * jax.lax.rsqrt(var + EPS)
    bias = gb[1:2] - mean * scale
    # ONE MXU pass expands [scale; bias] back to per-column values.
    sbe = jnp.dot(jnp.concatenate([scale, bias], axis=0), gt,
                  preferred_element_type=jnp.float32)                 # (2, C*HW)
    return jnp.maximum(y * sbe[0:1] + sbe[1:2], 0.0)                  # FMA + ReLU


def _netg_fused_kernel(z_ref, m1_ref, m2_hbm, m3_hbm,
                       gt1_ref, gb1_ref, gt2_ref, gb2_ref,
                       o_ref, m2_vmem, m3_vmem, dma_sem,
                       *, inv_n1, inv_n2):
    # Prefetch layer-2/3 weight matrices HBM -> VMEM; these DMAs overlap with
    # the layer-1 matmul + BN below.
    cp2 = pltpu.make_async_copy(m2_hbm, m2_vmem, dma_sem.at[0])
    cp3 = pltpu.make_async_copy(m3_hbm, m3_vmem, dma_sem.at[1])
    cp2.start()
    cp3.start()

    wdt = m1_ref.dtype  # bf16 weight matrices; MXU accumulation / VPU math f32

    # Layer 1: ConvT(nz, 2ngf, 4, 1, 0) + BN + ReLU -> (B, 2ngf*16)
    y = jnp.dot(z_ref[...].astype(wdt), m1_ref[...],
                preferred_element_type=jnp.float32)
    a = _bn_relu(y, gt1_ref[...], gb1_ref[...], inv_n1)

    # Layer 2: ConvT(2ngf, ngf, 4, 2, 1) + BN + ReLU -> (B, ngf*64)
    cp2.wait()
    y = jnp.dot(a.astype(wdt), m2_vmem[...], preferred_element_type=jnp.float32)
    a = _bn_relu(y, gt2_ref[...], gb2_ref[...], inv_n2)

    # Layer 3: ConvT(ngf, nc, 4, 2, 1) + Tanh -> (B, nc*256), lane-dense store
    cp3.wait()
    y = jnp.dot(a.astype(wdt), m3_vmem[...], preferred_element_type=jnp.float32)
    o_ref[...] = jnp.tanh(y)


# ---------------- weight preprocessing (runs once, host-side JAX) ----------

def _convt_unrolled_matrix(w, h_in, w_in, stride, pad):
    """Dense M s.t. flatten_chw(ConvTranspose2d(x)) = flatten_chw(x) @ M.

    w: torch ConvTranspose2d weight layout (Cin, Cout, K, K).
    Input flattened in (ci, iy, ix) order, output in (co, oy, ox) order.
    Returns M: (Cin*Hin*Win, Cout*Hout*Wout) and (Hout, Wout).
    """
    c_in, c_out, k, _ = w.shape
    h_out = (h_in - 1) * stride - 2 * pad + k
    w_out = (w_in - 1) * stride - 2 * pad + k
    # kernel index hit by (input row iy, output row oy): kh = oy - iy*s + p
    kh = jnp.arange(h_out)[None, :] - jnp.arange(h_in)[:, None] * stride + pad
    kw = jnp.arange(w_out)[None, :] - jnp.arange(w_in)[:, None] * stride + pad
    vh = (kh >= 0) & (kh < k)                                # (Hin, Hout)
    vw = (kw >= 0) & (kw < k)                                # (Win, Wout)
    wh = jnp.take(w, jnp.clip(kh, 0, k - 1), axis=2)         # (Ci,Co,Hi,Ho,K)
    whw = jnp.take(wh, jnp.clip(kw, 0, k - 1), axis=4)       # (Ci,Co,Hi,Ho,Wi,Wo)
    mask = (vh[:, :, None, None] & vw[None, None, :, :]).astype(w.dtype)
    m = whw * mask[None, None]
    m = m.transpose(0, 2, 4, 1, 3, 5)                        # (Ci,Hi,Wi,Co,Ho,Wo)
    return m.reshape(c_in * h_in * w_in, c_out * h_out * w_out), (h_out, w_out)


def init_netg_params(key, nz=8, ngf=8, nc=1, weight_dtype=jnp.bfloat16):
    k1, k2, k3 = jax.random.split(key, 3)
    # DCGAN init: conv weights ~ N(0, 0.02); BN gamma=1, beta=0 (torch default).
    wc1 = 0.02 * jax.random.normal(k1, (nz, ngf * 2, 4, 4), jnp.float32)
    wc2 = 0.02 * jax.random.normal(k2, (ngf * 2, ngf, 4, 4), jnp.float32)
    wc3 = 0.02 * jax.random.normal(k3, (ngf, nc, 4, 4), jnp.float32)

    m1, (ho1, wo1) = _convt_unrolled_matrix(wc1, 1, 1, 1, 0)       # (nz, 2ngf*16)
    m2, (ho2, wo2) = _convt_unrolled_matrix(wc2, ho1, wo1, 2, 1)   # (.., ngf*64)
    m3, (ho3, wo3) = _convt_unrolled_matrix(wc3, ho2, wo2, 2, 1)   # (.., nc*256)

    c1, c2 = ngf * 2, ngf
    hw1, hw2 = ho1 * wo1, ho2 * wo2
    # Lane-dense (C, C*HW) 0/1 expansion matrices; the channel reduction reuses
    # them with a transposed contraction, so the lane-sparse (C*HW, C) form is
    # never materialized or DMA'd.
    gt1 = jnp.repeat(jnp.eye(c1, dtype=jnp.float32), hw1, axis=1)  # (c1, c1*HW1)
    gt2 = jnp.repeat(jnp.eye(c2, dtype=jnp.float32), hw2, axis=1)  # (c2, c2*HW2)

    params = dict(
        m1=m1.astype(weight_dtype),
        m2=m2.astype(weight_dtype),
        m3=m3.astype(weight_dtype),
        gt1=gt1, gt2=gt2,
        gb1=jnp.concatenate([jnp.ones((1, c1), jnp.float32),
                             jnp.zeros((1, c1), jnp.float32)], axis=0),
        gb2=jnp.concatenate([jnp.ones((1, c2), jnp.float32),
                             jnp.zeros((1, c2), jnp.float32)], axis=0),
    )
    meta = dict(nc=nc, h_out=ho3, w_out=wo3, hw1=hw1, hw2=hw2)
    return params, meta


# ------------------------------ forward wrapper -----------------------------

def make_netg_forward(meta):
    nc, ho, wo = meta["nc"], meta["h_out"], meta["w_out"]
    hw1, hw2 = meta["hw1"], meta["hw2"]

    def netg_forward(params, z):
        """NetG.forward(input) = decoder(input); z is NCHW latent (B, nz, 1, 1)."""
        b = z.shape[0]
        z_flat = z.reshape(b, -1)                      # (B, nz); Hin = Win = 1
        kernel = functools.partial(
            _netg_fused_kernel,
            inv_n1=1.0 / float(b * hw1),               # BN count = N*H*W
            inv_n2=1.0 / float(b * hw2),
        )
        vmem = pl.BlockSpec(memory_space=pltpu.MemorySpace.VMEM)
        hbm = pl.BlockSpec(memory_space=pl.ANY)        # manual prefetch in-kernel
        m2, m3 = params["m2"], params["m3"]
        out_flat = pl.pallas_call(
            kernel,
            out_shape=jax.ShapeDtypeStruct((b, m3.shape[1]), jnp.float32),
            in_specs=[vmem, vmem, hbm, hbm, vmem, vmem, vmem, vmem],
            out_specs=vmem,
            scratch_shapes=[
                pltpu.VMEM(m2.shape, m2.dtype),
                pltpu.VMEM(m3.shape, m3.dtype),
                pltpu.SemaphoreType.DMA((2,)),
            ],
        )(z_flat, params["m1"], m2, m3,
          params["gt1"], params["gb1"], params["gt2"], params["gb2"])
        # (B, nc*Ho*Wo) in (c, h, w) order -> NCHW
        return out_flat.reshape(b, nc, ho, wo)

    return jax.jit(netg_forward)


# ------------------------- pure-jnp mirror reference ------------------------

def _reference_forward(params, z, meta):
    """jnp mirror of the kernel math (same dtypes) for correctness checking."""
    b = z.shape[0]
    x = z.reshape(b, -1)
    wdt = params["m1"].dtype

    def bn_relu(y, gt, gb, inv_n):
        s = jnp.sum(y, axis=0, keepdims=True)
        ss = jnp.sum(y * y, axis=0, keepdims=True)
        mean = (s @ gt.T) * inv_n
        var = jnp.maximum((ss @ gt.T) * inv_n - mean * mean, 0.0)
        scale = gb[0:1] * jax.lax.rsqrt(var + EPS)
        bias = gb[1:2] - mean * scale
        return jnp.maximum(y * (scale @ gt) + (bias @ gt), 0.0)

    y = jnp.dot(x.astype(wdt), params["m1"], preferred_element_type=jnp.float32)
    a = bn_relu(y, params["gt1"], params["gb1"], 1.0 / (b * meta["hw1"]))
    y = jnp.dot(a.astype(wdt), params["m2"], preferred_element_type=jnp.float32)
    a = bn_relu(y, params["gt2"], params["gb2"], 1.0 / (b * meta["hw2"]))
    y = jnp.dot(a.astype(wdt), params["m3"], preferred_element_type=jnp.float32)
    return jnp.tanh(y).reshape(b, meta["nc"], meta["h_out"], meta["w_out"])


if __name__ == "__main__":
    key = jax.random.PRNGKey(0)
    kp, kz = jax.random.split(key)
    # Batch many latents per call (perf review): B >= 128 keeps the MXU fed and
    # amortizes dispatch + weight DMA.  Use multiples of 256 on v6e/v7x.
    B, nz, ngf, nc = 128, 8, 8, 1

    params, meta = init_netg_params(kp, nz=nz, ngf=ngf, nc=nc)
    z = jax.random.normal(kz, (B, nz, 1, 1), jnp.float32)  # NCHW latent

    netg = make_netg_forward(meta)
    out = jax.block_until_ready(netg(params, z))

    assert out.shape == (B, nc, 16, 16), out.shape
    assert bool(jnp.all(jnp.isfinite(out)))
    assert bool(jnp.all(jnp.abs(out) <= 1.0 + 1e-6))  # tanh range

    ref = _reference_forward(params, z, meta)
    max_err = float(jnp.max(jnp.abs(out - ref)))
    assert max_err < 5e-2, f"mismatch vs reference: max abs err {max_err}"
    print("KERNEL_OK")
</pallas_src>

<mosaic_0001>
module attributes {stable_mosaic.version = 11 : i64} {
  func.func @_netg_fused_kernel(%arg0: memref<128x8xf32, #tpu.memory_space<vmem>>, %arg1: memref<8x256xbf16, #tpu.memory_space<vmem>>, %arg2: memref<256x512xbf16, #tpu.memory_space<any>>, %arg3: memref<512x256xbf16, #tpu.memory_space<any>>, %arg4: memref<16x256xf32, #tpu.memory_space<vmem>>, %arg5: memref<2x16xf32, #tpu.memory_space<vmem>>, %arg6: memref<8x512xf32, #tpu.memory_space<vmem>>, %arg7: memref<2x8xf32, #tpu.memory_space<vmem>>, %arg8: memref<128x256xf32, #tpu.memory_space<vmem>>, %arg9: memref<256x512xbf16, #tpu.memory_space<vmem>>, %arg10: memref<512x256xbf16, #tpu.memory_space<vmem>>, %arg11: memref<2x!tpu.dma_semaphore, #tpu.memory_space<semaphore_mem>>) attributes {dimension_semantics = [], scalar_prefetch = 0 : i64, scratch_operands = 3 : i64, tpu.core_type = #tpu.core_type<tc>} {
    %c0_i32 = arith.constant 0 : i32
    %0 = tpu.memref_slice %arg11[%c0_i32] : memref<2x!tpu.dma_semaphore, #tpu.memory_space<semaphore_mem>> -> memref<1x!tpu.dma_semaphore, #tpu.memory_space<semaphore_mem>>
    %1 = tpu.memref_squeeze %0 : memref<1x!tpu.dma_semaphore, #tpu.memory_space<semaphore_mem>> -> memref<!tpu.dma_semaphore, #tpu.memory_space<semaphore_mem>>
    tpu.enqueue_dma source(%arg2 : memref<256x512xbf16, #tpu.memory_space<any>>) target(%arg9 : memref<256x512xbf16, #tpu.memory_space<vmem>>) target_semaphore(%1 : memref<!tpu.dma_semaphore, #tpu.memory_space<semaphore_mem>>)
    %c1_i32 = arith.constant 1 : i32
    %2 = tpu.memref_slice %arg11[%c1_i32] : memref<2x!tpu.dma_semaphore, #tpu.memory_space<semaphore_mem>> -> memref<1x!tpu.dma_semaphore, #tpu.memory_space<semaphore_mem>>
    %3 = tpu.memref_squeeze %2 : memref<1x!tpu.dma_semaphore, #tpu.memory_space<semaphore_mem>> -> memref<!tpu.dma_semaphore, #tpu.memory_space<semaphore_mem>>
    tpu.enqueue_dma source(%arg3 : memref<512x256xbf16, #tpu.memory_space<any>>) target(%arg10 : memref<512x256xbf16, #tpu.memory_space<vmem>>) target_semaphore(%3 : memref<!tpu.dma_semaphore, #tpu.memory_space<semaphore_mem>>)
    %c0 = arith.constant 0 : index
    %c0_0 = arith.constant 0 : index
    %4 = vector.load %arg0[%c0, %c0_0] : memref<128x8xf32, #tpu.memory_space<vmem>>, vector<128x8xf32>
    %5 = arith.truncf %4 : vector<128x8xf32> to vector<128x8xbf16>
    %c0_1 = arith.constant 0 : index
    %c0_2 = arith.constant 0 : index
    %6 = vector.load %arg1[%c0_1, %c0_2] : memref<8x256xbf16, #tpu.memory_space<vmem>>, vector<8x256xbf16>
    %cst = arith.constant dense<0.000000e+00> : vector<128x256xf32>
    %7 = tpu.matmul %5, %6, %cst {dimension_numbers = #tpu.dot_dimension_numbers<[1], [0], [0], [1], [0, 0, 1, 1], [], []>} : vector<128x8xbf16>, vector<8x256xbf16>, vector<128x256xf32> -> vector<128x256xf32>
    %c0_3 = arith.constant 0 : index
    %c0_4 = arith.constant 0 : index
    %8 = vector.load %arg4[%c0_3, %c0_4] : memref<16x256xf32, #tpu.memory_space<vmem>>, vector<16x256xf32>
    %c0_5 = arith.constant 0 : index
    %c0_6 = arith.constant 0 : index
    %9 = vector.load %arg5[%c0_5, %c0_6] : memref<2x16xf32, #tpu.memory_space<vmem>>, vector<2x16xf32>
    %cst_7 = arith.constant dense<0.000000e+00> : vector<256xf32>
    %10 = vector.multi_reduction <add>, %7, %cst_7 [0] : vector<128x256xf32> to vector<256xf32>
    %11 = vector.shape_cast %10 : vector<256xf32> to vector<1x256xf32>
    %12 = arith.mulf %7, %7 : vector<128x256xf32>
    %cst_8 = arith.constant dense<0.000000e+00> : vector<256xf32>
    %13 = vector.multi_reduction <add>, %12, %cst_8 [0] : vector<128x256xf32> to vector<256xf32>
    %14 = vector.shape_cast %13 : vector<256xf32> to vector<1x256xf32>
    %15 = tpu.concatenate %11, %14 in 0 : vector<1x256xf32>, vector<1x256xf32> -> vector<2x256xf32>
    %cst_9 = arith.constant dense<0.000000e+00> : vector<2x16xf32>
    %16 = tpu.matmul %15, %8, %cst_9 {dimension_numbers = #tpu.dot_dimension_numbers<[1], [1], [0], [0], [0, 0, 1, 0], [], []>} : vector<2x256xf32>, vector<16x256xf32>, vector<2x16xf32> -> vector<2x16xf32>
    %17 = vector.extract_strided_slice %16 {offsets = [0, 0], sizes = [1, 16], strides = [1, 1]} : vector<2x16xf32> to vector<1x16xf32>
    %cst_10 = arith.constant 4.8828125E-4 : f32
    %18 = vector.broadcast %cst_10 : f32 to vector<1x16xf32>
    %19 = arith.mulf %17, %18 : vector<1x16xf32>
    %20 = vector.extract_strided_slice %16 {offsets = [1, 0], sizes = [1, 16], strides = [1, 1]} : vector<2x16xf32> to vector<1x16xf32>
    %cst_11 = arith.constant 4.8828125E-4 : f32
    %21 = vector.broadcast %cst_11 : f32 to vector<1x16xf32>
    %22 = arith.mulf %20, %21 : vector<1x16xf32>
    %23 = arith.mulf %19, %19 : vector<1x16xf32>
    %24 = arith.subf %22, %23 : vector<1x16xf32>
    %cst_12 = arith.constant 0.000000e+00 : f32
    %25 = vector.broadcast %cst_12 : f32 to vector<1x16xf32>
    %26 = arith.maximumf %24, %25 : vector<1x16xf32>
    %27 = vector.extract_strided_slice %9 {offsets = [0, 0], sizes = [1, 16], strides = [1, 1]} : vector<2x16xf32> to vector<1x16xf32>
    %cst_13 = arith.constant 9.99999974E-6 : f32
    %28 = vector.broadcast %cst_13 : f32 to vector<1x16xf32>
    %29 = arith.addf %26, %28 : vector<1x16xf32>
    %30 = math.rsqrt %29 : vector<1x16xf32>
    %31 = arith.mulf %27, %30 : vector<1x16xf32>
    %32 = vector.extract_strided_slice %9 {offsets = [1, 0], sizes = [1, 16], strides = [1, 1]} : vector<2x16xf32> to vector<1x16xf32>
    %33 = arith.mulf %19, %31 : vector<1x16xf32>
    %34 = arith.subf %32, %33 : vector<1x16xf32>
    %35 = tpu.concatenate %31, %34 in 0 : vector<1x16xf32>, vector<1x16xf32> -> vector<2x16xf32>
    %cst_14 = arith.constant dense<0.000000e+00> : vector<2x256xf32>
    %36 = tpu.matmul %35, %8, %cst_14 {dimension_numbers = #tpu.dot_dimension_numbers<[1], [0], [0], [1], [0, 0, 1, 1], [], []>} : vector<2x16xf32>, vector<16x256xf32>, vector<2x256xf32> -> vector<2x256xf32>
    %37 = vector.extract_strided_slice %36 {offsets = [0, 0], sizes = [1, 256], strides = [1, 1]} : vector<2x256xf32> to vector<1x256xf32>
    %38 = vector.broadcast %37 : vector<1x256xf32> to vector<128x256xf32>
    %39 = arith.mulf %7, %38 : vector<128x256xf32>
    %40 = vector.extract_strided_slice %36 {offsets = [1, 0], sizes = [1, 256], strides = [1, 1]} : vector<2x256xf32> to vector<1x256xf32>
    %41 = vector.broadcast %40 : vector<1x256xf32> to vector<128x256xf32>
    %42 = arith.addf %39, %41 : vector<128x256xf32>
    %cst_15 = arith.constant 0.000000e+00 : f32
    %43 = vector.broadcast %cst_15 : f32 to vector<128x256xf32>
    %44 = arith.maximumf %42, %43 : vector<128x256xf32>
    %c0_i32_16 = arith.constant 0 : i32
    %45 = tpu.memref_slice %arg11[%c0_i32_16] : memref<2x!tpu.dma_semaphore, #tpu.memory_space<semaphore_mem>> -> memref<1x!tpu.dma_semaphore, #tpu.memory_space<semaphore_mem>>
    %46 = tpu.memref_squeeze %45 : memref<1x!tpu.dma_semaphore, #tpu.memory_space<semaphore_mem>> -> memref<!tpu.dma_semaphore, #tpu.memory_space<semaphore_mem>>
    tpu.wait_dma2 semaphore(%46 : memref<!tpu.dma_semaphore, #tpu.memory_space<semaphore_mem>>) src(%arg2 : memref<256x512xbf16, #tpu.memory_space<any>>) dst(%arg9 : memref<256x512xbf16, #tpu.memory_space<vmem>>)
    %47 = arith.truncf %44 : vector<128x256xf32> to vector<128x256xbf16>
    %c0_17 = arith.constant 0 : index
    %c0_18 = arith.constant 0 : index
    %48 = vector.load %arg9[%c0_17, %c0_18] : memref<256x512xbf16, #tpu.memory_space<vmem>>, vector<256x512xbf16>
    %cst_19 = arith.constant dense<0.000000e+00> : vector<128x512xf32>
    %49 = tpu.matmul %47, %48, %cst_19 {dimension_numbers = #tpu.dot_dimension_numbers<[1], [0], [0], [1], [0, 0, 1, 1], [], []>} : vector<128x256xbf16>, vector<256x512xbf16>, vector<128x512xf32> -> vector<128x512xf32>
    %c0_20 = arith.constant 0 : index
    %c0_21 = arith.constant 0 : index
    %50 = vector.load %arg6[%c0_20, %c0_21] : memref<8x512xf32, #tpu.memory_space<vmem>>, vector<8x512xf32>
    %c0_22 = arith.constant 0 : index
    %c0_23 = arith.constant 0 : index
    %51 = vector.load %arg7[%c0_22, %c0_23] : memref<2x8xf32, #tpu.memory_space<vmem>>, vector<2x8xf32>
    %cst_24 = arith.constant dense<0.000000e+00> : vector<512xf32>
    %52 = vector.multi_reduction <add>, %49, %cst_24 [0] : vector<128x512xf32> to vector<512xf32>
    %53 = vector.shape_cast %52 : vector<512xf32> to vector<1x512xf32>
    %54 = arith.mulf %49, %49 : vector<128x512xf32>
    %cst_25 = arith.constant dense<0.000000e+00> : vector<512xf32>
    %55 = vector.multi_reduction <add>, %54, %cst_25 [0] : vector<128x512xf32> to vector<512xf32>
    %56 = vector.shape_cast %55 : vector<512xf32> to vector<1x512xf32>
    %57 = tpu.concatenate %53, %56 in 0 : vector<1x512xf32>, vector<1x512xf32> -> vector<2x512xf32>
    %cst_26 = arith.constant dense<0.000000e+00> : vector<2x8xf32>
    %58 = tpu.matmul %57, %50, %cst_26 {dimension_numbers = #tpu.dot_dimension_numbers<[1], [1], [0], [0], [0, 0, 1, 0], [], []>} : vector<2x512xf32>, vector<8x512xf32>, vector<2x8xf32> -> vector<2x8xf32>
    %59 = vector.extract_strided_slice %58 {offsets = [0, 0], sizes = [1, 8], strides = [1, 1]} : vector<2x8xf32> to vector<1x8xf32>
    %cst_27 = arith.constant 1.22070313E-4 : f32
    %60 = vector.broadcast %cst_27 : f32 to vector<1x8xf32>
    %61 = arith.mulf %59, %60 : vector<1x8xf32>
    %62 = vector.extract_strided_slice %58 {offsets = [1, 0], sizes = [1, 8], strides = [1, 1]} : vector<2x8xf32> to vector<1x8xf32>
    %cst_28 = arith.constant 1.22070313E-4 : f32
    %63 = vector.broadcast %cst_28 : f32 to vector<1x8xf32>
    %64 = arith.mulf %62, %63 : vector<1x8xf32>
    %65 = arith.mulf %61, %61 : vector<1x8xf32>
    %66 = arith.subf %64, %65 : vector<1x8xf32>
    %cst_29 = arith.constant 0.000000e+00 : f32
    %67 = vector.broadcast %cst_29 : f32 to vector<1x8xf32>
    %68 = arith.maximumf %66, %67 : vector<1x8xf32>
    %69 = vector.extract_strided_slice %51 {offsets = [0, 0], sizes = [1, 8], strides = [1, 1]} : vector<2x8xf32> to vector<1x8xf32>
    %cst_30 = arith.constant 9.99999974E-6 : f32
    %70 = vector.broadcast %cst_30 : f32 to vector<1x8xf32>
    %71 = arith.addf %68, %70 : vector<1x8xf32>
    %72 = math.rsqrt %71 : vector<1x8xf32>
    %73 = arith.mulf %69, %72 : vector<1x8xf32>
    %74 = vector.extract_strided_slice %51 {offsets = [1, 0], sizes = [1, 8], strides = [1, 1]} : vector<2x8xf32> to vector<1x8xf32>
    %75 = arith.mulf %61, %73 : vector<1x8xf32>
    %76 = arith.subf %74, %75 : vector<1x8xf32>
    %77 = tpu.concatenate %73, %76 in 0 : vector<1x8xf32>, vector<1x8xf32> -> vector<2x8xf32>
    %cst_31 = arith.constant dense<0.000000e+00> : vector<2x512xf32>
    %78 = tpu.matmul %77, %50, %cst_31 {dimension_numbers = #tpu.dot_dimension_numbers<[1], [0], [0], [1], [0, 0, 1, 1], [], []>} : vector<2x8xf32>, vector<8x512xf32>, vector<2x512xf32> -> vector<2x512xf32>
    %79 = vector.extract_strided_slice %78 {offsets = [0, 0], sizes = [1, 512], strides = [1, 1]} : vector<2x512xf32> to vector<1x512xf32>
    %80 = vector.broadcast %79 : vector<1x512xf32> to vector<128x512xf32>
    %81 = arith.mulf %49, %80 : vector<128x512xf32>
    %82 = vector.extract_strided_slice %78 {offsets = [1, 0], sizes = [1, 512], strides = [1, 1]} : vector<2x512xf32> to vector<1x512xf32>
    %83 = vector.broadcast %82 : vector<1x512xf32> to vector<128x512xf32>
    %84 = arith.addf %81, %83 : vector<128x512xf32>
    %cst_32 = arith.constant 0.000000e+00 : f32
    %85 = vector.broadcast %cst_32 : f32 to vector<128x512xf32>
    %86 = arith.maximumf %84, %85 : vector<128x512xf32>
    %c1_i32_33 = arith.constant 1 : i32
    %87 = tpu.memref_slice %arg11[%c1_i32_33] : memref<2x!tpu.dma_semaphore, #tpu.memory_space<semaphore_mem>> -> memref<1x!tpu.dma_semaphore, #tpu.memory_space<semaphore_mem>>
    %88 = tpu.memref_squeeze %87 : memref<1x!tpu.dma_semaphore, #tpu.memory_space<semaphore_mem>> -> memref<!tpu.dma_semaphore, #tpu.memory_space<semaphore_mem>>
    tpu.wait_dma2 semaphore(%88 : memref<!tpu.dma_semaphore, #tpu.memory_space<semaphore_mem>>) src(%arg3 : memref<512x256xbf16, #tpu.memory_space<any>>) dst(%arg10 : memref<512x256xbf16, #tpu.memory_space<vmem>>)
    %89 = arith.truncf %86 : vector<128x512xf32> to vector<128x512xbf16>
    %c0_34 = arith.constant 0 : index
    %c0_35 = arith.constant 0 : index
    %90 = vector.load %arg10[%c0_34, %c0_35] : memref<512x256xbf16, #tpu.memory_space<vmem>>, vector<512x256xbf16>
    %cst_36 = arith.constant dense<0.000000e+00> : vector<128x256xf32>
    %91 = tpu.matmul %89, %90, %cst_36 {dimension_numbers = #tpu.dot_dimension_numbers<[1], [0], [0], [1], [0, 0, 1, 1], [], []>} : vector<128x512xbf16>, vector<512x256xbf16>, vector<128x256xf32> -> vector<128x256xf32>
    %92 = math.tanh %91 : vector<128x256xf32>
    %c0_37 = arith.constant 0 : index
    %c0_38 = arith.constant 0 : index
    %93 = vector.load %arg8[%c0_37, %c0_38] : memref<128x256xf32, #tpu.memory_space<vmem>>, vector<128x256xf32>
    tpu.vector_store %arg8[%c0_37, %c0_38], %92 {strides = array<i32>} : memref<128x256xf32, #tpu.memory_space<vmem>>, vector<128x256xf32>,
    return
  }
}

</mosaic_0001>

<llo_original>
// kernel: netg_forward.1
$region0: #{netg_forward.1}
  #allocation0 [shape = 'u32[]', space=smem, size = 0x4, offset = 0x4, fixed_abs, tag = 'smem constant byte address 0x4 - core index']
  #allocation1 [shape = 'u32[72,128]{1,0:T(1,128)}', space=vmem, size = 0x9000, scoped, tag = 'internal scratch']
  #allocation2 [shape = 'bf16[256,512]{1,0:T(8,128)(2,1)}', space=vmem, size = 0x40000, scoped, tag = 'scratch operand']
  #allocation3 [shape = 'bf16[512,256]{1,0:T(8,128)(2,1)}', space=vmem, size = 0x40000, scoped, tag = 'scratch operand']
  #allocation4 [shape = 's32[2]{0}', space=sflag, size = 0x8, scoped, tag = 'scratch operand']
  #allocation5 [shape = 's32[]', space=sflag, size = 0x4, offset = 0, fixed_abs, tag = 'sflag constant byte address 0x0 - dummy sync flag']
  #allocation6 [shape = 's32[]', space=sflag, size = 0x4, offset = 0, fixed_abs, tag = 'sflag constant byte address 0x0 - dummy sync flag']
  #allocation7 [shape = 'u32[]', space=smem, size = 0x4, offset = 0x44, fixed_abs, tag = 'smem constant byte address 0x44 - assertion arg 0']
  #allocation8 [shape = 'u32[]', space=smem, size = 0x4, offset = 0x48, fixed_abs, tag = 'smem constant byte address 0x48 - assertion arg 1']
  #allocation9 [shape = 's32[]', space=sflag, size = 0x4, offset = 0, fixed_abs, tag = 'sflag constant byte address 0x0 - dummy sync flag']
  #allocation10 [shape = 's32[]', space=sflag, size = 0x4, offset = 0, fixed_abs, tag = 'sflag constant byte address 0x0 - dummy sync flag']
  %s0 = inlined_call_operand.vmem [shape: f32[128,8], index: 0, kind: input, shape index: {}]
  %s1 = inlined_call_operand.vmem [shape: bf16[8,256], index: 1, kind: input, shape index: {}]
  %s2 = inlined_call_operand.hbm [shape: bf16[256,512], index: 2, kind: input, shape index: {}]
  %s3 = inlined_call_operand.hbm [shape: bf16[512,256], index: 3, kind: input, shape index: {}]
  %s4 = inlined_call_operand.vmem [shape: f32[16,256], index: 4, kind: input, shape index: {}]
  %s5 = inlined_call_operand.vmem [shape: f32[2,16], index: 5, kind: input, shape index: {}]
  %s6 = inlined_call_operand.vmem [shape: f32[8,512], index: 6, kind: input, shape index: {}]
  %s7 = inlined_call_operand.vmem [shape: f32[2,8], index: 7, kind: input, shape index: {}]
  %s8 = inlined_call_operand.vmem [shape: f32[128,256], index: 8, kind: output, shape index: {}]
  %s9 = sld [smem:[#allocation0]]
  $region42: #{netg_forward.1} parent=0
    _
  %s11 = ssub.s32 1, %s9
  %s12 = scalar_select 0, %s11, %s9
  // Predicated region
  $region2: #{netg_forward.1} parent=0 // pred_check
    _
  $region3: #{netg_forward.1} parent=0 // pred_check_branch
    %14 = sbr.rel (0) target = $region5
  $region4: #{netg_forward.1} parent=0 // pred_region
    _
  $region5: #{netg_forward.1} parent=0 // pred_fallthru
    _
  // Predicated region
  $region6: #{netg_forward.1} parent=0 // pred_check
    _
  $region7: #{netg_forward.1} parent=0 // pred_check_branch
    %16 = sbr.rel (0) target = $region9
  $region8: #{netg_forward.1} parent=0 // pred_region
    _
  $region9: #{netg_forward.1} parent=0 // pred_fallthru
    _
  // Predicated region
  $region10: #{netg_forward.1} parent=0 // pred_check
    _
  $region11: #{netg_forward.1} parent=0 // pred_check_branch
    %18 = sbr.rel (0) target = $region13
  $region12: #{netg_forward.1} parent=0 // pred_region
    _
  $region13: #{netg_forward.1} parent=0 // pred_fallthru
    _
  // Predicated region
  $region14: #{netg_forward.1} parent=0 // pred_check
    _
  $region15: #{netg_forward.1} parent=0 // pred_check_branch
    %20 = sbr.rel (0) target = $region17
  $region16: #{netg_forward.1} parent=0 // pred_region
    _
  $region17: #{netg_forward.1} parent=0 // pred_fallthru
    _
  // Predicated region
  $region18: #{netg_forward.1} parent=0 // pred_check
    _
  $region19: #{netg_forward.1} parent=0 // pred_check_branch
    %22 = sbr.rel (0) target = $region21
  $region20: #{netg_forward.1} parent=0 // pred_region
    _
  $region21: #{netg_forward.1} parent=0 // pred_fallthru
    _
  // Predicated region
  $region22: #{netg_forward.1} parent=0 // pred_check
    _
  $region23: #{netg_forward.1} parent=0 // pred_check_branch
    %24 = sbr.rel (0) target = $region25
  $region24: #{netg_forward.1} parent=0 // pred_region
    _
  $region25: #{netg_forward.1} parent=0 // pred_fallthru
    _
  // Predicated region
  $region26: #{netg_forward.1} parent=0 // pred_check
    _
  $region27: #{netg_forward.1} parent=0 // pred_check_branch
    %27 = sbr.rel target = $region29
  $region28: #{netg_forward.1} parent=0 // pred_region
    %28 = sst [smem:[#allocation7]] [#allocation6]
    %29 = sst [smem:[#allocation8]] [#allocation5]
  $region29: #{netg_forward.1} parent=0 // pred_fallthru
    _
  %31 = shalt.err (0)
  %s33 = sshll.u32 %s2, 4
  %s34 = int_to_ptr.hbm [resolvable:$true] %s33
  %s35 = sshll.u32 [#allocation2], 4
  %s36 = int_to_ptr.vmem [resolvable:$true] %s35
  %38 = dma.hbm_to_vmem [thread:$0]  %s34, 8192, %s36, [#allocation4]
  %s39 = scalar_lea.sflag [#allocation4], 1
  // Predicated region
  $region30: #{netg_forward.1} parent=0 // pred_check
    _
  $region31: #{netg_forward.1} parent=0 // pred_check_branch
    %41 = sbr.rel target = $region33
  $region32: #{netg_forward.1} parent=0 // pred_region
    %42 = sst [smem:[#allocation7]] [#allocation10]
    %43 = sst [smem:[#allocation8]] [#allocation9]
  $region33: #{netg_forward.1} parent=0 // pred_fallthru
    _
  %45 = shalt.err (0)
  %s47 = sshll.u32 %s3, 4
  %s48 = int_to_ptr.hbm [resolvable:$true] %s47
  %s49 = sshll.u32 [#allocation3], 4
  %s50 = int_to_ptr.vmem [resolvable:$true] %s49
  %52 = dma.hbm_to_vmem [thread:$0]  %s48, 8192, %s50, %s39
  %v53 = vld [vmem:[%s0] sm:$0xff]
  %v54 = vld [vmem:[%s0 + $0x8] sm:$0xff]
  %v55 = vld [vmem:[%s0 + $0x10] sm:$0xff]
  %v56 = vld [vmem:[%s0 + $0x18] sm:$0xff]
  %v57 = vld [vmem:[%s0 + $0x20] sm:$0xff]
  %v58 = vld [vmem:[%s0 + $0x28] sm:$0xff]
  %v59 = vld [vmem:[%s0 + $0x30] sm:$0xff]
  %v60 = vld [vmem:[%s0 + $0x38] sm:$0xff]
  %v61 = vld [vmem:[%s0 + $0x40] sm:$0xff]
  %v62 = vld [vmem:[%s0 + $0x48] sm:$0xff]
  %v63 = vld [vmem:[%s0 + $0x50] sm:$0xff]
  %v64 = vld [vmem:[%s0 + $0x58] sm:$0xff]
  %v65 = vld [vmem:[%s0 + $0x60] sm:$0xff]
  %v66 = vld [vmem:[%s0 + $0x68] sm:$0xff]
  %v67 = vld [vmem:[%s0 + $0x70] sm:$0xff]
  %v68 = vld [vmem:[%s0 + $0x78] sm:$0xff]
  %v69 = vpack.c.bf16 %v54, %v53
  %v70 = vpack.c.bf16 %v56, %v55
  %v71 = vpack.c.bf16 %v58, %v57
  %v72 = vpack.c.bf16 %v60, %v59
  %v73 = vpack.c.bf16 %v62, %v61
  %v74 = vpack.c.bf16 %v64, %v63
  %v75 = vpack.c.bf16 %v66, %v65
  %v76 = vpack.c.bf16 %v68, %v67
  %v77 = vld [vmem:[%s1] sm:$0xff]
  %v79 = vunpack.c.l.b16 %v77
  %v80 = vunpack.c.h.b16 %v77
  %v81 = vpack.c.b16 %v79, %v79
  %v82 = vpack.c.b16 %v80, %v80
  %vm83 = vcmask 64512
  %v85 = vsel %vm83, %v69, 0
  %v88 = vsel %vm83, %v70, 0
  %v91 = vsel %vm83, %v71, 0
  %v94 = vsel %vm83, %v72, 0
  %v97 = vsel %vm83, %v73, 0
  %v100 = vsel %vm83, %v74, 0
  %v103 = vsel %vm83, %v75, 0
  %v106 = vsel %vm83, %v76, 0
  %vm108 = vcmask 1043456
  %v110 = vsel %vm108, %v81, 0
  %v113 = vsel %vm108, %v82, 0
  %115 = vmatpush.bf16.msra.mxu0 0
  %116 = vmatpush.bf16.msra.mxu0 0
  %117 = vmatpush.bf16.msra.mxu0 0
  %118 = vmatpush.bf16.msra.mxu0 0
  %119 = vmatpush.bf16.msra.mxu0 0
  %120 = vmatpush.bf16.msra.mxu0 0
  %121 = vmatpush.bf16.msra.mxu0 0
  %122 = vmatpush.bf16.msra.mxu0 %v110
  %123 = vmatmul.bf16.gmra.mxu0 %v85
  %v124 = vpop.f32.mrf.mxu0
  %v125 = vadd.f32 0.0, %v124
  %v126 = vpop.f32.mrf.mxu0
  %v127 = vadd.f32 0.0, %v126
  %128 = vmatmul.bf16.gmra.mxu0 %v88
  %v129 = vpop.f32.mrf.mxu0
  %v130 = vadd.f32 0.0, %v129
  %v131 = vpop.f32.mrf.mxu0
  %v132 = vadd.f32 0.0, %v131
  %133 = vmatmul.bf16.gmra.mxu0 %v91
  %v134 = vpop.f32.mrf.mxu0
  %v135 = vadd.f32 0.0, %v134
  %v136 = vpop.f32.mrf.mxu0
  %v137 = vadd.f32 0.0, %v136
  %138 = vmatmul.bf16.gmra.mxu0 %v94
  %v139 = vpop.f32.mrf.mxu0
  %v140 = vadd.f32 0.0, %v139
  %v141 = vpop.f32.mrf.mxu0
  %v142 = vadd.f32 0.0, %v141
  %143 = vmatmul.bf16.gmra.mxu0 %v97
  %v144 = vpop.f32.mrf.mxu0
  %v145 = vadd.f32 0.0, %v144
  %v146 = vpop.f32.mrf.mxu0
  %v147 = vadd.f32 0.0, %v146
  %148 = vmatmul.bf16.gmra.mxu0 %v100
  %v149 = vpop.f32.mrf.mxu0
  %v150 = vadd.f32 0.0, %v149
  %v151 = vpop.f32.mrf.mxu0
  %v152 = vadd.f32 0.0, %v151
  %153 = vmatmul.bf16.gmra.mxu0 %v103
  %v154 = vpop.f32.mrf.mxu0
  %v155 = vadd.f32 0.0, %v154
  %v156 = vpop.f32.mrf.mxu0
  %v157 = vadd.f32 0.0, %v156
  %158 = vmatmul.bf16.gmra.mxu0 %v106
  %v159 = vpop.f32.mrf.mxu0
  %v160 = vadd.f32 0.0, %v159
  %v161 = vpop.f32.mrf.mxu0
  %v162 = vadd.f32 0.0, %v161
  %163 = vdwg.mxu0
  %164 = vmatpush.bf16.msra.mxu0 0
  %165 = vmatpush.bf16.msra.mxu0 0
  %166 = vmatpush.bf16.msra.mxu0 0
  %167 = vmatpush.bf16.msra.mxu0 0
  %168 = vmatpush.bf16.msra.mxu0 0
  %169 = vmatpush.bf16.msra.mxu0 0
  %170 = vmatpush.bf16.msra.mxu0 0
  %171 = vmatpush.bf16.msra.mxu0 %v113
  %172 = vmatmul.bf16.gmra.mxu0 %v85
  %v173 = vpop.f32.mrf.mxu0
  %v174 = vadd.f32 0.0, %v173
  %v175 = vpop.f32.mrf.mxu0
  %v176 = vadd.f32 0.0, %v175
  %177 = vmatmul.bf16.gmra.mxu0 %v88
  %v178 = vpop.f32.mrf.mxu0
  %v179 = vadd.f32 0.0, %v178
  %v180 = vpop.f32.mrf.mxu0
  %v181 = vadd.f32 0.0, %v180
  %182 = vmatmul.bf16.gmra.mxu0 %v91
  %v183 = vpop.f32.mrf.mxu0
  %v184 = vadd.f32 0.0, %v183
  %v185 = vpop.f32.mrf.mxu0
  %v186 = vadd.f32 0.0, %v185
  %187 = vmatmul.bf16.gmra.mxu0 %v94
  %v188 = vpop.f32.mrf.mxu0
  %v189 = vadd.f32 0.0, %v188
  %v190 = vpop.f32.mrf.mxu0
  %v191 = vadd.f32 0.0, %v190
  %192 = vmatmul.bf16.gmra.mxu0 %v97
  %v193 = vpop.f32.mrf.mxu0
  %v194 = vadd.f32 0.0, %v193
  %v195 = vpop.f32.mrf.mxu0
  %v196 = vadd.f32 0.0, %v195
  %197 = vmatmul.bf16.gmra.mxu0 %v100
  %v198 = vpop.f32.mrf.mxu0
  %v199 = vadd.f32 0.0, %v198
  %v200 = vpop.f32.mrf.mxu0
  %v201 = vadd.f32 0.0, %v200
  %202 = vmatmul.bf16.gmra.mxu0 %v103
  %v203 = vpop.f32.mrf.mxu0
  %v204 = vadd.f32 0.0, %v203
  %v205 = vpop.f32.mrf.mxu0
  %v206 = vadd.f32 0.0, %v205
  %207 = vmatmul.bf16.gmra.mxu0 %v106
  %v208 = vpop.f32.mrf.mxu0
  %v209 = vadd.f32 0.0, %v208
  %v210 = vpop.f32.mrf.mxu0
  %v211 = vadd.f32 0.0, %v210
  %212 = vdwg.mxu0
  %v213 = vld [vmem:[%s4] sm:$0xff]
  %v214 = vld [vmem:[%s4 + $0x8] sm:$0xff]
  %v215 = vld [vmem:[%s4 + $0x10] sm:$0xff]
  %v216 = vld [vmem:[%s4 + $0x18] sm:$0xff]
  %v217 = vld [vmem:[%s5] sm:$0x3]
  %v218 = vadd.f32 %v125, %v127
  %v219 = vadd.f32 %v218, %v130
  %v220 = vadd.f32 %v219, %v132
  %v221 = vadd.f32 %v220, %v135
  %v222 = vadd.f32 %v221, %v137
  %v223 = vadd.f32 %v222, %v140
  %v224 = vadd.f32 %v223, %v142
  %v225 = vadd.f32 %v224, %v145
  %v226 = vadd.f32 %v225, %v147
  %v227 = vadd.f32 %v226, %v150
  %v228 = vadd.f32 %v227, %v152
  %v229 = vadd.f32 %v228, %v155
  %v230 = vadd.f32 %v229, %v157
  %v231 = vadd.f32 %v230, %v160
  %v232 = vadd.f32 %v231, %v162
  %v233 = vrot.slane %v232, 4
  %v234 = vadd.f32 %v232, %v233
  %v235 = vrot.slane %v234, 2
  %v236 = vadd.f32 %v234, %v235
  %v237 = vrot.slane %v236, 1
  %v238 = vadd.f32 %v236, %v237
  %v239 = vadd.f32 %v174, %v176
  %v240 = vadd.f32 %v239, %v179
  %v241 = vadd.f32 %v240, %v181
  %v242 = vadd.f32 %v241, %v184
  %v243 = vadd.f32 %v242, %v186
  %v244 = vadd.f32 %v243, %v189
  %v245 = vadd.f32 %v244, %v191
  %v246 = vadd.f32 %v245, %v194
  %v247 = vadd.f32 %v246, %v196
  %v248 = vadd.f32 %v247, %v199
  %v249 = vadd.f32 %v248, %v201
  %v250 = vadd.f32 %v249, %v204
  %v251 = vadd.f32 %v250, %v206
  %v252 = vadd.f32 %v251, %v209
  %v253 = vadd.f32 %v252, %v211
  %v254 = vrot.slane %v253, 4
  %v255 = vadd.f32 %v253, %v254
  %v256 = vrot.slane %v255, 2
  %v257 = vadd.f32 %v255, %v256
  %v258 = vrot.slane %v257, 1
  %v259 = vadd.f32 %v257, %v258
  %v260 = vmul.f32 %v125, %v125
  %v261 = vmul.f32 %v174, %v174
  %v262 = vmul.f32 %v127, %v127
  %v263 = vmul.f32 %v176, %v176
  %v264 = vmul.f32 %v130, %v130
  %v265 = vmul.f32 %v179, %v179
  %v266 = vmul.f32 %v132, %v132
  %v267 = vmul.f32 %v181, %v181
  %v268 = vmul.f32 %v135, %v135
  %v269 = vmul.f32 %v184, %v184
  %v270 = vmul.f32 %v137, %v137
  %v271 = vmul.f32 %v186, %v186
  %v272 = vmul.f32 %v140, %v140
  %v273 = vmul.f32 %v189, %v189
  %v274 = vmul.f32 %v142, %v142
  %v275 = vmul.f32 %v191, %v191
  %v276 = vmul.f32 %v145, %v145
  %v277 = vmul.f32 %v194, %v194
  %v278 = vmul.f32 %v147, %v147
  %v279 = vmul.f32 %v196, %v196
  %v280 = vmul.f32 %v150, %v150
  %v281 = vmul.f32 %v199, %v199
  %v282 = vmul.f32 %v152, %v152
  %v283 = vmul.f32 %v201, %v201
  %v284 = vmul.f32 %v155, %v155
  %v285 = vmul.f32 %v204, %v204
  %v286 = vmul.f32 %v157, %v157
  %v287 = vmul.f32 %v206, %v206
  %v288 = vmul.f32 %v160, %v160
  %v289 = vmul.f32 %v209, %v209
  %v290 = vmul.f32 %v162, %v162
  %v291 = vmul.f32 %v211, %v211
  %v292 = vadd.f32 %v260, %v262
  %v293 = vadd.f32 %v292, %v264
  %v294 = vadd.f32 %v293, %v266
  %v295 = vadd.f32 %v294, %v268
  %v296 = vadd.f32 %v295, %v270
  %v297 = vadd.f32 %v296, %v272
  %v298 = vadd.f32 %v297, %v274
  %v299 = vadd.f32 %v298, %v276
  %v300 = vadd.f32 %v299, %v278
  %v301 = vadd.f32 %v300, %v280
  %v302 = vadd.f32 %v301, %v282
  %v303 = vadd.f32 %v302, %v284
  %v304 = vadd.f32 %v303, %v286
  %v305 = vadd.f32 %v304, %v288
  %v306 = vadd.f32 %v305, %v290
  %v307 = vrot.slane %v306, 4
  %v308 = vadd.f32 %v306, %v307
  %v309 = vrot.slane %v308, 2
  %v310 = vadd.f32 %v308, %v309
  %v311 = vrot.slane %v310, 1
  %v312 = vadd.f32 %v310, %v311
  %v313 = vadd.f32 %v261, %v263
  %v314 = vadd.f32 %v313, %v265
  %v315 = vadd.f32 %v314, %v267
  %v316 = vadd.f32 %v315, %v269
  %v317 = vadd.f32 %v316, %v271
  %v318 = vadd.f32 %v317, %v273
  %v319 = vadd.f32 %v318, %v275
  %v320 = vadd.f32 %v319, %v277
  %v321 = vadd.f32 %v320, %v279
  %v322 = vadd.f32 %v321, %v281
  %v323 = vadd.f32 %v322, %v283
  %v324 = vadd.f32 %v323, %v285
  %v325 = vadd.f32 %v324, %v287
  %v326 = vadd.f32 %v325, %v289
  %v327 = vadd.f32 %v326, %v291
  %v328 = vrot.slane %v327, 4
  %v329 = vadd.f32 %v327, %v328
  %v330 = vrot.slane %v329, 2
  %v331 = vadd.f32 %v329, %v330
  %v332 = vrot.slane %v331, 1
  %v333 = vadd.f32 %v331, %v332
  %vm334 = vcmask 1040384
  %v335 = vsel %vm334, %v238, %v312
  %v336 = vsel %vm334, %v259, %v333
  %337 = vmatpush.xpose.msra.mxu0 0.0
  %338 = vmatpush.xpose.msra.mxu0 0.0
  %339 = vmatpush.xpose.msra.mxu0 0.0
  %340 = vmatpush.xpose.msra.mxu0 0.0
  %341 = vmatpush.xpose.msra.mxu0 0.0
  %342 = vmatpush.xpose.msra.mxu0 0.0
  %343 = vmatpush.xpose.msra.mxu0 0.0
  %344 = vmatpush.xpose.msra.mxu0 0.0
  %345 = vmatpush.xpose.msra.mxu0 0.0
  %346 = vmatpush.xpose.msra.mxu0 0.0
  %347 = vmatpush.xpose.msra.mxu0 0.0
  %348 = vmatpush.xpose.msra.mxu0 0.0
  %349 = vmatpush.xpose.msra.mxu0 0.0
  %350 = vmatpush.xpose.msra.mxu0 0.0
  %351 = vmatpush.xpose.msra.mxu0 %v215
  %352 = vmatpush.xpose.msra.mxu0 %v213
  %353 = vmatmul.f32.gmra.mxu0 %v335
  %v354 = vpop.f32.mrf.mxu0
  %v355 = vadd.f32 0.0, %v354
  %356 = vdwg.mxu0
  %357 = vmatpush.xpose.msra.mxu0 0.0
  %358 = vmatpush.xpose.msra.mxu0 0.0
  %359 = vmatpush.xpose.msra.mxu0 0.0
  %360 = vmatpush.xpose.msra.mxu0 0.0
  %361 = vmatpush.xpose.msra.mxu0 0.0
  %362 = vmatpush.xpose.msra.mxu0 0.0
  %363 = vmatpush.xpose.msra.mxu0 0.0
  %364 = vmatpush.xpose.msra.mxu0 0.0
  %365 = vmatpush.xpose.msra.mxu0 0.0
  %366 = vmatpush.xpose.msra.mxu0 0.0
  %367 = vmatpush.xpose.msra.mxu0 0.0
  %368 = vmatpush.xpose.msra.mxu0 0.0
  %369 = vmatpush.xpose.msra.mxu0 0.0
  %370 = vmatpush.xpose.msra.mxu0 0.0
  %371 = vmatpush.xpose.msra.mxu0 %v216
  %372 = vmatpush.xpose.msra.mxu0 %v214
  %373 = vmatmul.f32.gmra.mxu0 %v336
  %v374 = vpop.f32.mrf.mxu0
  %v375 = vadd.f32 %v355, %v374
  %376 = vdwg.mxu0
  %v377 = vmul.f32 %v375, 0.00048828125
  %v378 = vmul.f32 %v377, %v377
  %v380 = vrot.slane %v378, 7
  %v382 = vsub.f32 %v377, %v380
  %v383 = vmax.f32 %v382, 0.0
  %v384 = vadd.f32 %v383, 1e-05
  %v385 = vrsqrt.pop %v384
  %v386 = vmul.f32 %v385, %v384
  %v387 = vmul.f32 %v386, %v385
  %v388 = vmul.f32 0.5, %v387
  %v389 = vsub.f32 1.5, %v388
  %v390 = vmul.f32 %v385, %v389
  %vm391 = vweird.f32 %v384
  %vm392 = vweird.f32 %v385
  %vm393 = vmor %vm391, %vm392
  %v394 = vsel %vm393, %v385, %v390
  %v396 = vrot.slane %v394, 1
  %v398 = vmul.f32 %v217, %v396
  %v399 = vmul.f32 %v377, %v398
  %v401 = vrot.slane %v399, 7
  %v403 = vsub.f32 %v217, %v401
  %v404 = vsel %vm334, %v398, %v403
  %vm405 = vcmask 130048
  %v407 = vsel %vm405, %v404, 0
  %409 = vmatpush.msra.mxu0 0.0
  %410 = vmatpush.msra.mxu0 0.0
  %411 = vmatpush.msra.mxu0 0.0
  %412 = vmatpush.msra.mxu0 0.0
  %413 = vmatpush.msra.mxu0 0.0
  %414 = vmatpush.msra.mxu0 0.0
  %415 = vmatpush.msra.mxu0 0.0
  %416 = vmatpush.msra.mxu0 0.0
  %417 = vmatpush.msra.mxu0 0.0
  %418 = vmatpush.msra.mxu0 0.0
  %419 = vmatpush.msra.mxu0 0.0
  %420 = vmatpush.msra.mxu0 0.0
  %421 = vmatpush.msra.mxu0 0.0
  %422 = vmatpush.msra.mxu0 0.0
  %423 = vmatpush.msra.mxu0 %v215
  %424 = vmatpush.msra.mxu0 %v213
  %425 = vmatmul.f32.gmra.mxu0 %v407
  %v426 = vpop.f32.mrf.mxu0
  %v427 = vadd.f32 0.0, %v426
  %428 = vdwg.mxu0
  %429 = vmatpush.msra.mxu0 0.0
  %430 = vmatpush.msra.mxu0 0.0
  %431 = vmatpush.msra.mxu0 0.0
  %432 = vmatpush.msra.mxu0 0.0
  %433 = vmatpush.msra.mxu0 0.0
  %434 = vmatpush.msra.mxu0 0.0
  %435 = vmatpush.msra.mxu0 0.0
  %436 = vmatpush.msra.mxu0 0.0
  %437 = vmatpush.msra.mxu0 0.0
  %438 = vmatpush.msra.mxu0 0.0
  %439 = vmatpush.msra.mxu0 0.0
  %440 = vmatpush.msra.mxu0 0.0
  %441 = vmatpush.msra.mxu0 0.0
  %442 = vmatpush.msra.mxu0 0.0
  %443 = vmatpush.msra.mxu0 %v216
  %444 = vmatpush.msra.mxu0 %v214
  %445 = vmatmul.f32.gmra.mxu0 %v407
  %v446 = vpop.f32.mrf.mxu0
  %v447 = vadd.f32 0.0, %v446
  %448 = vdwg.mxu0
  %v449 = vperm.slane %v427, 0
  %v450 = vperm.slane %v447, 0
  %v451 = vmul.f32 %v125, %v449
  %v452 = vmul.f32 %v174, %v450
  %v453 = vmul.f32 %v127, %v449
  %v454 = vmul.f32 %v176, %v450
  %v455 = vmul.f32 %v130, %v449
  %v456 = vmul.f32 %v179, %v450
  %v457 = vmul.f32 %v132, %v449
  %v458 = vmul.f32 %v181, %v450
  %v459 = vmul.f32 %v135, %v449
  %v460 = vmul.f32 %v184, %v450
  %v461 = vmul.f32 %v137, %v449
  %v462 = vmul.f32 %v186, %v450
  %v463 = vmul.f32 %v140, %v449
  %v464 = vmul.f32 %v189, %v450
  %v465 = vmul.f32 %v142, %v449
  %v466 = vmul.f32 %v191, %v450
  %v467 = vmul.f32 %v145, %v449
  %v468 = vmul.f32 %v194, %v450
  %v469 = vmul.f32 %v147, %v449
  %v470 = vmul.f32 %v196, %v450
  %v471 = vmul.f32 %v150, %v449
  %v472 = vmul.f32 %v199, %v450
  %v473 = vmul.f32 %v152, %v449
  %v474 = vmul.f32 %v201, %v450
  %v475 = vmul.f32 %v155, %v449
  %v476 = vmul.f32 %v204, %v450
  %v477 = vmul.f32 %v157, %v449
  %v478 = vmul.f32 %v206, %v450
  %v479 = vmul.f32 %v160, %v449
  %v480 = vmul.f32 %v209, %v450
  %v481 = vmul.f32 %v162, %v449
  %v482 = vmul.f32 %v211, %v450
  %v483 = vperm.slane %v427, 1
  %v484 = vperm.slane %v447, 1
  %v485 = vadd.f32 %v451, %v483
  %v486 = vadd.f32 %v452, %v484
  %v487 = vadd.f32 %v453, %v483
  %v488 = vadd.f32 %v454, %v484
  %v489 = vadd.f32 %v455, %v483
  %v490 = vadd.f32 %v456, %v484
  %v491 = vadd.f32 %v457, %v483
  %v492 = vadd.f32 %v458, %v484
  %v493 = vadd.f32 %v459, %v483
  %v494 = vadd.f32 %v460, %v484
  %v495 = vadd.f32 %v461, %v483
  %v496 = vadd.f32 %v462, %v484
  %v497 = vadd.f32 %v463, %v483
  %v498 = vadd.f32 %v464, %v484
  %v499 = vadd.f32 %v465, %v483
  %v500 = vadd.f32 %v466, %v484
  %v501 = vadd.f32 %v467, %v483
  %v502 = vadd.f32 %v468, %v484
  %v503 = vadd.f32 %v469, %v483
  %v504 = vadd.f32 %v470, %v484
  %v505 = vadd.f32 %v471, %v483
  %v506 = vadd.f32 %v472, %v484
  %v507 = vadd.f32 %v473, %v483
  %v508 = vadd.f32 %v474, %v484
  %v509 = vadd.f32 %v475, %v483
  %v510 = vadd.f32 %v476, %v484
  %v511 = vadd.f32 %v477, %v483
  %v512 = vadd.f32 %v478, %v484
  %v513 = vadd.f32 %v479, %v483
  %v514 = vadd.f32 %v480, %v484
  %v515 = vadd.f32 %v481, %v483
  %v516 = vadd.f32 %v482, %v484
  %v517 = vmax.f32 %v485, 0.0
  %v518 = vmax.f32 %v486, 0.0
  %v519 = vmax.f32 %v487, 0.0
  %v520 = vmax.f32 %v488, 0.0
  %v521 = vmax.f32 %v489, 0.0
  %v522 = vmax.f32 %v490, 0.0
  %v523 = vmax.f32 %v491, 0.0
  %v524 = vmax.f32 %v492, 0.0
  %v525 = vmax.f32 %v493, 0.0
  %v526 = vmax.f32 %v494, 0.0
  %v527 = vmax.f32 %v495, 0.0
  %v528 = vmax.f32 %v496, 0.0
  %v529 = vmax.f32 %v497, 0.0
  %v530 = vmax.f32 %v498, 0.0
  %v531 = vmax.f32 %v499, 0.0
  %v532 = vmax.f32 %v500, 0.0
  %v533 = vmax.f32 %v501, 0.0
  %v534 = vmax.f32 %v502, 0.0
  %v535 = vmax.f32 %v503, 0.0
  %v536 = vmax.f32 %v504, 0.0
  %v537 = vmax.f32 %v505, 0.0
  %v538 = vmax.f32 %v506, 0.0
  %v539 = vmax.f32 %v507, 0.0
  %v540 = vmax.f32 %v508, 0.0
  %v541 = vmax.f32 %v509, 0.0
  %v542 = vmax.f32 %v510, 0.0
  %v543 = vmax.f32 %v511, 0.0
  %v544 = vmax.f32 %v512, 0.0
  %v545 = vmax.f32 %v513, 0.0
  %v546 = vmax.f32 %v514, 0.0
  %v547 = vmax.f32 %v515, 0.0
  %v548 = vmax.f32 %v516, 0.0
  %s549 = smul.u32 4, 32
  %s550 = smul.u32 %s549, 4
  %s551 = sshll.u32 %s550, 4
  %552 = dma.done [#allocation4], %s551
  %v553 = vpack.c.bf16 %v519, %v517
  %v554 = vpack.c.bf16 %v520, %v518
  %v555 = vpack.c.bf16 %v523, %v521
  %v556 = vpack.c.bf16 %v524, %v522
  %v557 = vpack.c.bf16 %v527, %v525
  %v558 = vpack.c.bf16 %v528, %v526
  %v559 = vpack.c.bf16 %v531, %v529
  %v560 = vpack.c.bf16 %v532, %v530
  %v561 = vpack.c.bf16 %v535, %v533
  %v562 = vpack.c.bf16 %v536, %v534
  %v563 = vpack.c.bf16 %v539, %v537
  %v564 = vpack.c.bf16 %v540, %v538
  %v565 = vpack.c.bf16 %v543, %v541
  %v566 = vpack.c.bf16 %v544, %v542
  %v567 = vpack.c.bf16 %v547, %v545
  %v568 = vpack.c.bf16 %v548, %v546
  %v569 = vld [vmem:[#allocation2] sm:$0xff]
  %v570 = vld [vmem:[#allocation2 + $0x8] sm:$0xff]
  %v571 = vld [vmem:[#allocation2 + $0x10] sm:$0xff]
  %v572 = vld [vmem:[#allocation2 + $0x18] sm:$0xff]
  %v573 = vld [vmem:[#allocation2 + $0x20] sm:$0xff]
  %v574 = vld [vmem:[#allocation2 + $0x28] sm:$0xff]
  %v575 = vld [vmem:[#allocation2 + $0x30] sm:$0xff]
  %v576 = vld [vmem:[#allocation2 + $0x38] sm:$0xff]
  %v577 = vld [vmem:[#allocation2 + $0x40] sm:$0xff]
  %v578 = vld [vmem:[#allocation2 + $0x48] sm:$0xff]
  %v579 = vld [vmem:[#allocation2 + $0x50] sm:$0xff]
  %v580 = vld [vmem:[#allocation2 + $0x58] sm:$0xff]
  %v581 = vld [vmem:[#allocation2 + $0x60] sm:$0xff]
  %v582 = vld [vmem:[#allocation2 + $0x68] sm:$0xff]
  %v583 = vld [vmem:[#allocation2 + $0x70] sm:$0xff]
  %v584 = vld [vmem:[#allocation2 + $0x78] sm:$0xff]
  %v585 = vld [vmem:[#allocation2 + $0x80] sm:$0xff]
  %v586 = vld [vmem:[#allocation2 + $0x88] sm:$0xff]
  %v587 = vld [vmem:[#allocation2 + $0x90] sm:$0xff]
  %v588 = vld [vmem:[#allocation2 + $0x98] sm:$0xff]
  %v589 = vld [vmem:[#allocation2 + $0xa0] sm:$0xff]
  %v590 = vld [vmem:[#allocation2 + $0xa8] sm:$0xff]
  %v591 = vld [vmem:[#allocation2 + $0xb0] sm:$0xff]
  %v592 = vld [vmem:[#allocation2 + $0xb8] sm:$0xff]
  %v593 = vld [vmem:[#allocation2 + $0xc0] sm:$0xff]
  %v594 = vld [vmem:[#allocation2 + $0xc8] sm:$0xff]
  %v595 = vld [vmem:[#allocation2 + $0xd0] sm:$0xff]
  %v596 = vld [vmem:[#allocation2 + $0xd8] sm:$0xff]
  %v597 = vld [vmem:[#allocation2 + $0xe0] sm:$0xff]
  %v598 = vld [vmem:[#allocation2 + $0xe8] sm:$0xff]
  %v599 = vld [vmem:[#allocation2 + $0xf0] sm:$0xff]
  %v600 = vld [vmem:[#allocation2 + $0xf8] sm:$0xff]
  %v601 = vld [vmem:[#allocation2 + $0x100] sm:$0xff]
  %v602 = vld [vmem:[#allocation2 + $0x108] sm:$0xff]
  %v603 = vld [vmem:[#allocation2 + $0x110] sm:$0xff]
  %v604 = vld [vmem:[#allocation2 + $0x118] sm:$0xff]
  %v605 = vld [vmem:[#allocation2 + $0x120] sm:$0xff]
  %v606 = vld [vmem:[#allocation2 + $0x128] sm:$0xff]
  %v607 = vld [vmem:[#allocation2 + $0x130] sm:$0xff]
  %v608 = vld [vmem:[#allocation2 + $0x138] sm:$0xff]
  %v609 = vld [vmem:[#allocation2 + $0x140] sm:$0xff]
  %v610 = vld [vmem:[#allocation2 + $0x148] sm:$0xff]
  %v611 = vld [vmem:[#allocation2 + $0x150] sm:$0xff]
  %v612 = vld [vmem:[#allocation2 + $0x158] sm:$0xff]
  %v613 = vld [vmem:[#allocation2 + $0x160] sm:$0xff]
  %v614 = vld [vmem:[#allocation2 + $0x168] sm:$0xff]
  %v615 = vld [vmem:[#allocation2 + $0x170] sm:$0xff]
  %v616 = vld [vmem:[#allocation2 + $0x178] sm:$0xff]
  %v617 = vld [vmem:[#allocation2 + $0x180] sm:$0xff]
  %v618 = vld [vmem:[#allocation2 + $0x188] sm:$0xff]
  %v619 = vld [vmem:[#allocation2 + $0x190] sm:$0xff]
  %v620 = vld [vmem:[#allocation2 + $0x198] sm:$0xff]
  %v621 = vld [vmem:[#allocation2 + $0x1a0] sm:$0xff]
  %v622 = vld [vmem:[#allocation2 + $0x1a8] sm:$0xff]
  %v623 = vld [vmem:[#allocation2 + $0x1b0] sm:$0xff]
  %v624 = vld [vmem:[#allocation2 + $0x1b8] sm:$0xff]
  %v625 = vld [vmem:[#allocation2 + $0x1c0] sm:$0xff]
  %v626 = vld [vmem:[#allocation2 + $0x1c8] sm:$0xff]
  %v627 = vld [vmem:[#allocation2 + $0x1d0] sm:$0xff]
  %v628 = vld [vmem:[#allocation2 + $0x1d8] sm:$0xff]
  %v629 = vld [vmem:[#allocation2 + $0x1e0] sm:$0xff]
  %v630 = vld [vmem:[#allocation2 + $0x1e8] sm:$0xff]
  %v631 = vld [vmem:[#allocation2 + $0x1f0] sm:$0xff]
  %v632 = vld [vmem:[#allocation2 + $0x1f8] sm:$0xff]
  %v697 = vunpack.c.l.b16 %v569
  %v698 = vunpack.c.h.b16 %v569
  %v699 = vunpack.c.l.b16 %v570
  %v700 = vunpack.c.h.b16 %v570
  %v701 = vunpack.c.l.b16 %v571
  %v702 = vunpack.c.h.b16 %v571
  %v703 = vunpack.c.l.b16 %v572
  %v704 = vunpack.c.h.b16 %v572
  %v705 = vunpack.c.l.b16 %v573
  %v706 = vunpack.c.h.b16 %v573
  %v707 = vunpack.c.l.b16 %v574
  %v708 = vunpack.c.h.b16 %v574
  %v709 = vunpack.c.l.b16 %v575
  %v710 = vunpack.c.h.b16 %v575
  %v711 = vunpack.c.l.b16 %v576
  %v712 = vunpack.c.h.b16 %v576
  %v713 = vunpack.c.l.b16 %v577
  %v714 = vunpack.c.h.b16 %v577
  %v715 = vunpack.c.l.b16 %v578
  %v716 = vunpack.c.h.b16 %v578
  %v717 = vunpack.c.l.b16 %v579
  %v718 = vunpack.c.h.b16 %v579
  %v719 = vunpack.c.l.b16 %v580
  %v720 = vunpack.c.h.b16 %v580
  %v721 = vunpack.c.l.b16 %v581
  %v722 = vunpack.c.h.b16 %v581
  %v723 = vunpack.c.l.b16 %v582
  %v724 = vunpack.c.h.b16 %v582
  %v725 = vunpack.c.l.b16 %v583
  %v726 = vunpack.c.h.b16 %v583
  %v727 = vunpack.c.l.b16 %v584
  %v728 = vunpack.c.h.b16 %v584
  %v729 = vunpack.c.l.b16 %v585
  %v730 = vunpack.c.h.b16 %v585
  %v731 = vunpack.c.l.b16 %v586
  %v732 = vunpack.c.h.b16 %v586
  %v733 = vunpack.c.l.b16 %v587
  %v734 = vunpack.c.h.b16 %v587
  %v735 = vunpack.c.l.b16 %v588
  %v736 = vunpack.c.h.b16 %v588
  %v737 = vunpack.c.l.b16 %v589
  %v738 = vunpack.c.h.b16 %v589
  %v739 = vunpack.c.l.b16 %v590
  %v740 = vunpack.c.h.b16 %v590
  %v741 = vunpack.c.l.b16 %v591
  %v742 = vunpack.c.h.b16 %v591
  %v743 = vunpack.c.l.b16 %v592
  %v744 = vunpack.c.h.b16 %v592
  %v745 = vunpack.c.l.b16 %v593
  %v746 = vunpack.c.h.b16 %v593
  %v747 = vunpack.c.l.b16 %v594
  %v748 = vunpack.c.h.b16 %v594
  %v749 = vunpack.c.l.b16 %v595
  %v750 = vunpack.c.h.b16 %v595
  %v751 = vunpack.c.l.b16 %v596
  %v752 = vunpack.c.h.b16 %v596
  %v753 = vunpack.c.l.b16 %v597
  %v754 = vunpack.c.h.b16 %v597
  %v755 = vunpack.c.l.b16 %v598
  %v756 = vunpack.c.h.b16 %v598
  %v757 = vunpack.c.l.b16 %v599
  %v758 = vunpack.c.h.b16 %v599
  %v759 = vunpack.c.l.b16 %v600
  %v760 = vunpack.c.h.b16 %v600
  %v761 = vunpack.c.l.b16 %v601
  %v762 = vunpack.c.h.b16 %v601
  %v763 = vunpack.c.l.b16 %v602
  %v764 = vunpack.c.h.b16 %v602
  %v765 = vunpack.c.l.b16 %v603
  %v766 = vunpack.c.h.b16 %v603
  %v767 = vunpack.c.l.b16 %v604
  %v768 = vunpack.c.h.b16 %v604
  %v769 = vunpack.c.l.b16 %v605
  %v770 = vunpack.c.h.b16 %v605
  %v771 = vunpack.c.l.b16 %v606
  %v772 = vunpack.c.h.b16 %v606
  %v773 = vunpack.c.l.b16 %v607
  %v774 = vunpack.c.h.b16 %v607
  %v775 = vunpack.c.l.b16 %v608
  %v776 = vunpack.c.h.b16 %v608
  %v777 = vunpack.c.l.b16 %v609
  %v778 = vunpack.c.h.b16 %v609
  %v779 = vunpack.c.l.b16 %v610
  %v780 = vunpack.c.h.b16 %v610
  %v781 = vunpack.c.l.b16 %v611
  %v782 = vunpack.c.h.b16 %v611
  %v783 = vunpack.c.l.b16 %v612
  %v784 = vunpack.c.h.b16 %v612
  %v785 = vunpack.c.l.b16 %v613
  %v786 = vunpack.c.h.b16 %v613
  %v787 = vunpack.c.l.b16 %v614
  %v788 = vunpack.c.h.b16 %v614
  %v789 = vunpack.c.l.b16 %v615
  %v790 = vunpack.c.h.b16 %v615
  %v791 = vunpack.c.l.b16 %v616
  %v792 = vunpack.c.h.b16 %v616
  %v793 = vunpack.c.l.b16 %v617
  %v794 = vunpack.c.h.b16 %v617
  %v795 = vunpack.c.l.b16 %v618
  %v796 = vunpack.c.h.b16 %v618
  %v797 = vunpack.c.l.b16 %v619
  %v798 = vunpack.c.h.b16 %v619
  %v799 = vunpack.c.l.b16 %v620
  %v800 = vunpack.c.h.b16 %v620
  %v801 = vunpack.c.l.b16 %v621
  %v802 = vunpack.c.h.b16 %v621
  %v803 = vunpack.c.l.b16 %v622
  %v804 = vunpack.c.h.b16 %v622
  %v805 = vunpack.c.l.b16 %v623
  %v806 = vunpack.c.h.b16 %v623
  %v807 = vunpack.c.l.b16 %v624
  %v808 = vunpack.c.h.b16 %v624
  %v809 = vunpack.c.l.b16 %v625
  %v810 = vunpack.c.h.b16 %v625
  %v811 = vunpack.c.l.b16 %v626
  %v812 = vunpack.c.h.b16 %v626
  %v813 = vunpack.c.l.b16 %v627
  %v814 = vunpack.c.h.b16 %v627
  %v815 = vunpack.c.l.b16 %v628
  %v816 = vunpack.c.h.b16 %v628
  %v817 = vunpack.c.l.b16 %v629
  %v818 = vunpack.c.h.b16 %v629
  %v819 = vunpack.c.l.b16 %v630
  %v820 = vunpack.c.h.b16 %v630
  %v821 = vunpack.c.l.b16 %v631
  %v822 = vunpack.c.h.b16 %v631
  %v823 = vunpack.c.l.b16 %v632
  %v824 = vunpack.c.h.b16 %v632
  %v825 = vpack.c.b16 %v701, %v697
  %v826 = vpack.c.b16 %v702, %v698
  %v827 = vpack.c.b16 %v703, %v699
  %v828 = vpack.c.b16 %v704, %v700
  %v829 = vpack.c.b16 %v709, %v705
  %v830 = vpack.c.b16 %v710, %v706
  %v831 = vpack.c.b16 %v711, %v707
  %v832 = vpack.c.b16 %v712, %v708
  %v833 = vpack.c.b16 %v717, %v713
  %v834 = vpack.c.b16 %v718, %v714
  %v835 = vpack.c.b16 %v719, %v715
  %v836 = vpack.c.b16 %v720, %v716
  %v837 = vpack.c.b16 %v725, %v721
  %v838 = vpack.c.b16 %v726, %v722
  %v839 = vpack.c.b16 %v727, %v723
  %v840 = vpack.c.b16 %v728, %v724
  %v841 = vpack.c.b16 %v733, %v729
  %v842 = vpack.c.b16 %v734, %v730
  %v843 = vpack.c.b16 %v735, %v731
  %v844 = vpack.c.b16 %v736, %v732
  %v845 = vpack.c.b16 %v741, %v737
  %v846 = vpack.c.b16 %v742, %v738
  %v847 = vpack.c.b16 %v743, %v739
  %v848 = vpack.c.b16 %v744, %v740
  %v849 = vpack.c.b16 %v749, %v745
  %v850 = vpack.c.b16 %v750, %v746
  %v851 = vpack.c.b16 %v751, %v747
  %v852 = vpack.c.b16 %v752, %v748
  %v853 = vpack.c.b16 %v757, %v753
  %v854 = vpack.c.b16 %v758, %v754
  %v855 = vpack.c.b16 %v759, %v755
  %v856 = vpack.c.b16 %v760, %v756
  %v857 = vpack.c.b16 %v765, %v761
  %v858 = vpack.c.b16 %v766, %v762
  %v859 = vpack.c.b16 %v767, %v763
  %v860 = vpack.c.b16 %v768, %v764
  %v861 = vpack.c.b16 %v773, %v769
  %v862 = vpack.c.b16 %v774, %v770
  %v863 = vpack.c.b16 %v775, %v771
  %v864 = vpack.c.b16 %v776, %v772
  %v865 = vpack.c.b16 %v781, %v777
  %v866 = vpack.c.b16 %v782, %v778
  %v867 = vpack.c.b16 %v783, %v779
  %v868 = vpack.c.b16 %v784, %v780
  %v869 = vpack.c.b16 %v789, %v785
  %v870 = vpack.c.b16 %v790, %v786
  %v871 = vpack.c.b16 %v791, %v787
  %v872 = vpack.c.b16 %v792, %v788
  %v873 = vpack.c.b16 %v797, %v793
  %v874 = vpack.c.b16 %v798, %v794
  %v875 = vpack.c.b16 %v799, %v795
  %v876 = vpack.c.b16 %v800, %v796
  %v877 = vpack.c.b16 %v805, %v801
  %v878 = vpack.c.b16 %v806, %v802
  %v879 = vpack.c.b16 %v807, %v803
  %v880 = vpack.c.b16 %v808, %v804
  %v881 = vpack.c.b16 %v813, %v809
  %v882 = vpack.c.b16 %v814, %v810
  %v883 = vpack.c.b16 %v815, %v811
  %v884 = vpack.c.b16 %v816, %v812
  %v885 = vpack.c.b16 %v821, %v817
  %v886 = vpack.c.b16 %v822, %v818
  %v887 = vpack.c.b16 %v823, %v819
  %v888 = vpack.c.b16 %v824, %v820
  %953 = vmatpush.bf16.msra.mxu0 %v853
  %954 = vmatpush.bf16.msra.mxu0 %v849
  %955 = vmatpush.bf16.msra.mxu0 %v845
  %956 = vmatpush.bf16.msra.mxu0 %v841
  %957 = vmatpush.bf16.msra.mxu0 %v837
  %958 = vmatpush.bf16.msra.mxu0 %v833
  %959 = vmatpush.bf16.msra.mxu0 %v829
  %960 = vmatpush.bf16.msra.mxu0 %v825
  %961 = vmatmul.bf16.gmra.mxu0 %v553
  %v962 = vpop.f32.mrf.mxu0
  %v963 = vadd.f32 0.0, %v962
  %v964 = vpop.f32.mrf.mxu0
  %v965 = vadd.f32 0.0, %v964
  %966 = vmatmul.bf16.gmra.mxu0 %v555
  %v967 = vpop.f32.mrf.mxu0
  %v968 = vadd.f32 0.0, %v967
  %v969 = vpop.f32.mrf.mxu0
  %v970 = vadd.f32 0.0, %v969
  %971 = vmatmul.bf16.gmra.mxu0 %v557
  %v972 = vpop.f32.mrf.mxu0
  %v973 = vadd.f32 0.0, %v972
  %v974 = vpop.f32.mrf.mxu0
  %v975 = vadd.f32 0.0, %v974
  %976 = vmatmul.bf16.gmra.mxu0 %v559
  %v977 = vpop.f32.mrf.mxu0
  %v978 = vadd.f32 0.0, %v977
  %v979 = vpop.f32.mrf.mxu0
  %v980 = vadd.f32 0.0, %v979
  %981 = vmatmul.bf16.gmra.mxu0 %v561
  %v982 = vpop.f32.mrf.mxu0
  %v983 = vadd.f32 0.0, %v982
  %v984 = vpop.f32.mrf.mxu0
  %v985 = vadd.f32 0.0, %v984
  %986 = vmatmul.bf16.gmra.mxu0 %v563
  %v987 = vpop.f32.mrf.mxu0
  %v988 = vadd.f32 0.0, %v987
  %v989 = vpop.f32.mrf.mxu0
  %v990 = vadd.f32 0.0, %v989
  %991 = vmatmul.bf16.gmra.mxu0 %v565
  %v992 = vpop.f32.mrf.mxu0
  %v993 = vadd.f32 0.0, %v992
  %v994 = vpop.f32.mrf.mxu0
  %v995 = vadd.f32 0.0, %v994
  %996 = vmatmul.bf16.gmra.mxu0 %v567
  %v997 = vpop.f32.mrf.mxu0
  %v998 = vadd.f32 0.0, %v997
  %v999 = vpop.f32.mrf.mxu0
  %v1000 = vadd.f32 0.0, %v999
  %1001 = vdwg.mxu0
  %1002 = vmatpush.bf16.msra.mxu0 %v885
  %1003 = vmatpush.bf16.msra.mxu0 %v881
  %1004 = vmatpush.bf16.msra.mxu0 %v877
  %1005 = vmatpush.bf16.msra.mxu0 %v873
  %1006 = vmatpush.bf16.msra.mxu0 %v869
  %1007 = vmatpush.bf16.msra.mxu0 %v865
  %1008 = vmatpush.bf16.msra.mxu0 %v861
  %1009 = vmatpush.bf16.msra.mxu0 %v857
  %1010 = vmatmul.bf16.gmra.mxu0 %v554
  %v1011 = vpop.f32.mrf.mxu0
  %v1012 = vadd.f32 %v963, %v1011
  %v1013 = vpop.f32.mrf.mxu0
  %v1014 = vadd.f32 %v965, %v1013
  %1015 = vmatmul.bf16.gmra.mxu0 %v556
  %v1016 = vpop.f32.mrf.mxu0
  %v1017 = vadd.f32 %v968, %v1016
  %v1018 = vpop.f32.mrf.mxu0
  %v1019 = vadd.f32 %v970, %v1018
  %1020 = vmatmul.bf16.gmra.mxu0 %v558
  %v1021 = vpop.f32.mrf.mxu0
  %v1022 = vadd.f32 %v973, %v1021
  %v1023 = vpop.f32.mrf.mxu0
  %v1024 = vadd.f32 %v975, %v1023
  %1025 = vmatmul.bf16.gmra.mxu0 %v560
  %v1026 = vpop.f32.mrf.mxu0
  %v1027 = vadd.f32 %v978, %v1026
  %v1028 = vpop.f32.mrf.mxu0
  %v1029 = vadd.f32 %v980, %v1028
  %1030 = vmatmul.bf16.gmra.mxu0 %v562
  %v1031 = vpop.f32.mrf.mxu0
  %v1032 = vadd.f32 %v983, %v1031
  %v1033 = vpop.f32.mrf.mxu0
  %v1034 = vadd.f32 %v985, %v1033
  %1035 = vmatmul.bf16.gmra.mxu0 %v564
  %v1036 = vpop.f32.mrf.mxu0
  %v1037 = vadd.f32 %v988, %v1036
  %v1038 = vpop.f32.mrf.mxu0
  %v1039 = vadd.f32 %v990, %v1038
  %1040 = vmatmul.bf16.gmra.mxu0 %v566
  %v1041 = vpop.f32.mrf.mxu0
  %v1042 = vadd.f32 %v993, %v1041
  %v1043 = vpop.f32.mrf.mxu0
  %v1044 = vadd.f32 %v995, %v1043
  %1045 = vmatmul.bf16.gmra.mxu0 %v568
  %v1046 = vpop.f32.mrf.mxu0
  %v1047 = vadd.f32 %v998, %v1046
  %v1048 = vpop.f32.mrf.mxu0
  %v1049 = vadd.f32 %v1000, %v1048
  %1050 = vdwg.mxu0
  %1051 = vmatpush.bf16.msra.mxu0 %v854
  %1052 = vmatpush.bf16.msra.mxu0 %v850
  %1053 = vmatpush.bf16.msra.mxu0 %v846
  %1054 = vmatpush.bf16.msra.mxu0 %v842
  %1055 = vmatpush.bf16.msra.mxu0 %v838
  %1056 = vmatpush.bf16.msra.mxu0 %v834
  %1057 = vmatpush.bf16.msra.mxu0 %v830
  %1058 = vmatpush.bf16.msra.mxu0 %v826
  %1059 = vmatmul.bf16.gmra.mxu0 %v553
  %v1060 = vpop.f32.mrf.mxu0
  %v1061 = vadd.f32 0.0, %v1060
  %v1062 = vpop.f32.mrf.mxu0
  %v1063 = vadd.f32 0.0, %v1062
  %1064 = vmatmul.bf16.gmra.mxu0 %v555
  %v1065 = vpop.f32.mrf.mxu0
  %v1066 = vadd.f32 0.0, %v1065
  %v1067 = vpop.f32.mrf.mxu0
  %v1068 = vadd.f32 0.0, %v1067
  %1069 = vmatmul.bf16.gmra.mxu0 %v557
  %v1070 = vpop.f32.mrf.mxu0
  %v1071 = vadd.f32 0.0, %v1070
  %v1072 = vpop.f32.mrf.mxu0
  %v1073 = vadd.f32 0.0, %v1072
  %1074 = vmatmul.bf16.gmra.mxu0 %v559
  %v1075 = vpop.f32.mrf.mxu0
  %v1076 = vadd.f32 0.0, %v1075
  %v1077 = vpop.f32.mrf.mxu0
  %v1078 = vadd.f32 0.0, %v1077
  %1079 = vmatmul.bf16.gmra.mxu0 %v561
  %v1080 = vpop.f32.mrf.mxu0
  %v1081 = vadd.f32 0.0, %v1080
  %v1082 = vpop.f32.mrf.mxu0
  %v1083 = vadd.f32 0.0, %v1082
  %1084 = vmatmul.bf16.gmra.mxu0 %v563
  %v1085 = vpop.f32.mrf.mxu0
  %v1086 = vadd.f32 0.0, %v1085
  %v1087 = vpop.f32.mrf.mxu0
  %v1088 = vadd.f32 0.0, %v1087
  %1089 = vmatmul.bf16.gmra.mxu0 %v565
  %v1090 = vpop.f32.mrf.mxu0
  %v1091 = vadd.f32 0.0, %v1090
  %v1092 = vpop.f32.mrf.mxu0
  %v1093 = vadd.f32 0.0, %v1092
  %1094 = vmatmul.bf16.gmra.mxu0 %v567
  %v1095 = vpop.f32.mrf.mxu0
  %v1096 = vadd.f32 0.0, %v1095
  %v1097 = vpop.f32.mrf.mxu0
  %v1098 = vadd.f32 0.0, %v1097
  %1099 = vdwg.mxu0
  %1100 = vmatpush.bf16.msra.mxu0 %v886
  %1101 = vmatpush.bf16.msra.mxu0 %v882
  %1102 = vmatpush.bf16.msra.mxu0 %v878
  %1103 = vmatpush.bf16.msra.mxu0 %v874
  %1104 = vmatpush.bf16.msra.mxu0 %v870
  %1105 = vmatpush.bf16.msra.mxu0 %v866
  %1106 = vmatpush.bf16.msra.mxu0 %v862
  %1107 = vmatpush.bf16.msra.mxu0 %v858
  %1108 = vmatmul.bf16.gmra.mxu0 %v554
  %v1109 = vpop.f32.mrf.mxu0
  %v1110 = vadd.f32 %v1061, %v1109
  %v1111 = vpop.f32.mrf.mxu0
  %v1112 = vadd.f32 %v1063, %v1111
  %1113 = vmatmul.bf16.gmra.mxu0 %v556
  %v1114 = vpop.f32.mrf.mxu0
  %v1115 = vadd.f32 %v1066, %v1114
  %v1116 = vpop.f32.mrf.mxu0
  %v1117 = vadd.f32 %v1068, %v1116
  %1118 = vmatmul.bf16.gmra.mxu0 %v558
  %v1119 = vpop.f32.mrf.mxu0
  %v1120 = vadd.f32 %v1071, %v1119
  %v1121 = vpop.f32.mrf.mxu0
  %v1122 = vadd.f32 %v1073, %v1121
  %1123 = vmatmul.bf16.gmra.mxu0 %v560
  %v1124 = vpop.f32.mrf.mxu0
  %v1125 = vadd.f32 %v1076, %v1124
  %v1126 = vpop.f32.mrf.mxu0
  %v1127 = vadd.f32 %v1078, %v1126
  %1128 = vmatmul.bf16.gmra.mxu0 %v562
  %v1129 = vpop.f32.mrf.mxu0
  %v1130 = vadd.f32 %v1081, %v1129
  %v1131 = vpop.f32.mrf.mxu0
  %v1132 = vadd.f32 %v1083, %v1131
  %1133 = vmatmul.bf16.gmra.mxu0 %v564
  %v1134 = vpop.f32.mrf.mxu0
  %v1135 = vadd.f32 %v1086, %v1134
  %v1136 = vpop.f32.mrf.mxu0
  %v1137 = vadd.f32 %v1088, %v1136
  %1138 = vmatmul.bf16.gmra.mxu0 %v566
  %v1139 = vpop.f32.mrf.mxu0
  %v1140 = vadd.f32 %v1091, %v1139
  %v1141 = vpop.f32.mrf.mxu0
  %v1142 = vadd.f32 %v1093, %v1141
  %1143 = vmatmul.bf16.gmra.mxu0 %v568
  %v1144 = vpop.f32.mrf.mxu0
  %v1145 = vadd.f32 %v1096, %v1144
  %v1146 = vpop.f32.mrf.mxu0
  %v1147 = vadd.f32 %v1098, %v1146
  %1148 = vdwg.mxu0
  %1149 = vmatpush.bf16.msra.mxu0 %v855
  %1150 = vmatpush.bf16.msra.mxu0 %v851
  %1151 = vmatpush.bf16.msra.mxu0 %v847
  %1152 = vmatpush.bf16.msra.mxu0 %v843
  %1153 = vmatpush.bf16.msra.mxu0 %v839
  %1154 = vmatpush.bf16.msra.mxu0 %v835
  %1155 = vmatpush.bf16.msra.mxu0 %v831
  %1156 = vmatpush.bf16.msra.mxu0 %v827
  %1157 = vmatmul.bf16.gmra.mxu0 %v553
  %v1158 = vpop.f32.mrf.mxu0
  %v1159 = vadd.f32 0.0, %v1158
  %v1160 = vpop.f32.mrf.mxu0
  %v1161 = vadd.f32 0.0, %v1160
  %1162 = vmatmul.bf16.gmra.mxu0 %v555
  %v1163 = vpop.f32.mrf.mxu0
  %v1164 = vadd.f32 0.0, %v1163
  %v1165 = vpop.f32.mrf.mxu0
  %v1166 = vadd.f32 0.0, %v1165
  %1167 = vmatmul.bf16.gmra.mxu0 %v557
  %v1168 = vpop.f32.mrf.mxu0
  %v1169 = vadd.f32 0.0, %v1168
  %v1170 = vpop.f32.mrf.mxu0
  %v1171 = vadd.f32 0.0, %v1170
  %1172 = vmatmul.bf16.gmra.mxu0 %v559
  %v1173 = vpop.f32.mrf.mxu0
  %v1174 = vadd.f32 0.0, %v1173
  %v1175 = vpop.f32.mrf.mxu0
  %v1176 = vadd.f32 0.0, %v1175
  %1177 = vmatmul.bf16.gmra.mxu0 %v561
  %v1178 = vpop.f32.mrf.mxu0
  %v1179 = vadd.f32 0.0, %v1178
  %v1180 = vpop.f32.mrf.mxu0
  %v1181 = vadd.f32 0.0, %v1180
  %1182 = vmatmul.bf16.gmra.mxu0 %v563
  %v1183 = vpop.f32.mrf.mxu0
  %v1184 = vadd.f32 0.0, %v1183
  %v1185 = vpop.f32.mrf.mxu0
  %v1186 = vadd.f32 0.0, %v1185
  %1187 = vmatmul.bf16.gmra.mxu0 %v565
  %v1188 = vpop.f32.mrf.mxu0
  %v1189 = vadd.f32 0.0, %v1188
  %v1190 = vpop.f32.mrf.mxu0
  %v1191 = vadd.f32 0.0, %v1190
  %1192 = vmatmul.bf16.gmra.mxu0 %v567
  %v1193 = vpop.f32.mrf.mxu0
  %v1194 = vadd.f32 0.0, %v1193
  %v1195 = vpop.f32.mrf.mxu0
  %v1196 = vadd.f32 0.0, %v1195
  %1197 = vdwg.mxu0
  %1198 = vmatpush.bf16.msra.mxu0 %v887
  %1199 = vmatpush.bf16.msra.mxu0 %v883
  %1200 = vmatpush.bf16.msra.mxu0 %v879
  %1201 = vmatpush.bf16.msra.mxu0 %v875
  %1202 = vmatpush.bf16.msra.mxu0 %v871
  %1203 = vmatpush.bf16.msra.mxu0 %v867
  %1204 = vmatpush.bf16.msra.mxu0 %v863
  %1205 = vmatpush.bf16.msra.mxu0 %v859
  %1206 = vmatmul.bf16.gmra.mxu0 %v554
  %v1207 = vpop.f32.mrf.mxu0
  %v1208 = vadd.f32 %v1159, %v1207
  %v1209 = vpop.f32.mrf.mxu0
  %v1210 = vadd.f32 %v1161, %v1209
  %1211 = vmatmul.bf16.gmra.mxu0 %v556
  %v1212 = vpop.f32.mrf.mxu0
  %v1213 = vadd.f32 %v1164, %v1212
  %v1214 = vpop.f32.mrf.mxu0
  %v1215 = vadd.f32 %v1166, %v1214
  %1216 = vmatmul.bf16.gmra.mxu0 %v558
  %v1217 = vpop.f32.mrf.mxu0
  %v1218 = vadd.f32 %v1169, %v1217
  %v1219 = vpop.f32.mrf.mxu0
  %v1220 = vadd.f32 %v1171, %v1219
  %1221 = vmatmul.bf16.gmra.mxu0 %v560
  %v1222 = vpop.f32.mrf.mxu0
  %v1223 = vadd.f32 %v1174, %v1222
  %v1224 = vpop.f32.mrf.mxu0
  %v1225 = vadd.f32 %v1176, %v1224
  %1226 = vmatmul.bf16.gmra.mxu0 %v562
  %v1227 = vpop.f32.mrf.mxu0
  %v1228 = vadd.f32 %v1179, %v1227
  %v1229 = vpop.f32.mrf.mxu0
  %v1230 = vadd.f32 %v1181, %v1229
  %1231 = vmatmul.bf16.gmra.mxu0 %v564
  %v1232 = vpop.f32.mrf.mxu0
  %v1233 = vadd.f32 %v1184, %v1232
  %v1234 = vpop.f32.mrf.mxu0
  %v1235 = vadd.f32 %v1186, %v1234
  %1236 = vmatmul.bf16.gmra.mxu0 %v566
  %v1237 = vpop.f32.mrf.mxu0
  %v1238 = vadd.f32 %v1189, %v1237
  %v1239 = vpop.f32.mrf.mxu0
  %v1240 = vadd.f32 %v1191, %v1239
  %1241 = vmatmul.bf16.gmra.mxu0 %v568
  %v1242 = vpop.f32.mrf.mxu0
  %v1243 = vadd.f32 %v1194, %v1242
  %v1244 = vpop.f32.mrf.mxu0
  %v1245 = vadd.f32 %v1196, %v1244
  %1246 = vdwg.mxu0
  %1247 = vmatpush.bf16.msra.mxu0 %v856
  %1248 = vmatpush.bf16.msra.mxu0 %v852
  %1249 = vmatpush.bf16.msra.mxu0 %v848
  %1250 = vmatpush.bf16.msra.mxu0 %v844
  %1251 = vmatpush.bf16.msra.mxu0 %v840
  %1252 = vmatpush.bf16.msra.mxu0 %v836
  %1253 = vmatpush.bf16.msra.mxu0 %v832
  %1254 = vmatpush.bf16.msra.mxu0 %v828
  %1255 = vmatmul.bf16.gmra.mxu0 %v553
  %v1256 = vpop.f32.mrf.mxu0
  %v1257 = vadd.f32 0.0, %v1256
  %v1258 = vpop.f32.mrf.mxu0
  %v1259 = vadd.f32 0.0, %v1258
  %1260 = vmatmul.bf16.gmra.mxu0 %v555
  %v1261 = vpop.f32.mrf.mxu0
  %v1262 = vadd.f32 0.0, %v1261
  %v1263 = vpop.f32.mrf.mxu0
  %v1264 = vadd.f32 0.0, %v1263
  %1265 = vmatmul.bf16.gmra.mxu0 %v557
  %v1266 = vpop.f32.mrf.mxu0
  %v1267 = vadd.f32 0.0, %v1266
  %v1268 = vpop.f32.mrf.mxu0
  %v1269 = vadd.f32 0.0, %v1268
  %1270 = vmatmul.bf16.gmra.mxu0 %v559
  %v1271 = vpop.f32.mrf.mxu0
  %v1272 = vadd.f32 0.0, %v1271
  %v1273 = vpop.f32.mrf.mxu0
  %v1274 = vadd.f32 0.0, %v1273
  %1275 = vmatmul.bf16.gmra.mxu0 %v561
  %v1276 = vpop.f32.mrf.mxu0
  %v1277 = vadd.f32 0.0, %v1276
  %v1278 = vpop.f32.mrf.mxu0
  %v1279 = vadd.f32 0.0, %v1278
  %1280 = vmatmul.bf16.gmra.mxu0 %v563
  %v1281 = vpop.f32.mrf.mxu0
  %v1282 = vadd.f32 0.0, %v1281
  %v1283 = vpop.f32.mrf.mxu0
  %v1284 = vadd.f32 0.0, %v1283
  %1285 = vmatmul.bf16.gmra.mxu0 %v565
  %v1286 = vpop.f32.mrf.mxu0
  %v1287 = vadd.f32 0.0, %v1286
  %v1288 = vpop.f32.mrf.mxu0
  %v1289 = vadd.f32 0.0, %v1288
  %1290 = vmatmul.bf16.gmra.mxu0 %v567
  %v1291 = vpop.f32.mrf.mxu0
  %v1292 = vadd.f32 0.0, %v1291
  %v1293 = vpop.f32.mrf.mxu0
  %v1294 = vadd.f32 0.0, %v1293
  %1295 = vdwg.mxu0
  %1296 = vmatpush.bf16.msra.mxu0 %v888
  %1297 = vmatpush.bf16.msra.mxu0 %v884
  %1298 = vmatpush.bf16.msra.mxu0 %v880
  %1299 = vmatpush.bf16.msra.mxu0 %v876
  %1300 = vmatpush.bf16.msra.mxu0 %v872
  %1301 = vmatpush.bf16.msra.mxu0 %v868
  %1302 = vmatpush.bf16.msra.mxu0 %v864
  %1303 = vmatpush.bf16.msra.mxu0 %v860
  %1304 = vmatmul.bf16.gmra.mxu0 %v554
  %v1305 = vpop.f32.mrf.mxu0
  %v1306 = vadd.f32 %v1257, %v1305
  %v1307 = vpop.f32.mrf.mxu0
  %v1308 = vadd.f32 %v1259, %v1307
  %1309 = vmatmul.bf16.gmra.mxu0 %v556
  %v1310 = vpop.f32.mrf.mxu0
  %v1311 = vadd.f32 %v1262, %v1310
  %v1312 = vpop.f32.mrf.mxu0
  %v1313 = vadd.f32 %v1264, %v1312
  %1314 = vmatmul.bf16.gmra.mxu0 %v558
  %v1315 = vpop.f32.mrf.mxu0
  %v1316 = vadd.f32 %v1267, %v1315
  %v1317 = vpop.f32.mrf.mxu0
  %v1318 = vadd.f32 %v1269, %v1317
  %1319 = vmatmul.bf16.gmra.mxu0 %v560
  %v1320 = vpop.f32.mrf.mxu0
  %v1321 = vadd.f32 %v1272, %v1320
  %v1322 = vpop.f32.mrf.mxu0
  %v1323 = vadd.f32 %v1274, %v1322
  %1324 = vmatmul.bf16.gmra.mxu0 %v562
  %v1325 = vpop.f32.mrf.mxu0
  %v1326 = vadd.f32 %v1277, %v1325
  %v1327 = vpop.f32.mrf.mxu0
  %v1328 = vadd.f32 %v1279, %v1327
  %1329 = vmatmul.bf16.gmra.mxu0 %v564
  %v1330 = vpop.f32.mrf.mxu0
  %v1331 = vadd.f32 %v1282, %v1330
  %v1332 = vpop.f32.mrf.mxu0
  %v1333 = vadd.f32 %v1284, %v1332
  %1334 = vmatmul.bf16.gmra.mxu0 %v566
  %v1335 = vpop.f32.mrf.mxu0
  %v1336 = vadd.f32 %v1287, %v1335
  %v1337 = vpop.f32.mrf.mxu0
  %v1338 = vadd.f32 %v1289, %v1337
  %1339 = vmatmul.bf16.gmra.mxu0 %v568
  %v1340 = vpop.f32.mrf.mxu0
  %v1341 = vadd.f32 %v1292, %v1340
  %v1342 = vpop.f32.mrf.mxu0
  %v1343 = vadd.f32 %v1294, %v1342
  %1344 = vdwg.mxu0
  %v1345 = vld [vmem:[%s6] sm:$0xff]
  %v1346 = vld [vmem:[%s6 + $0x8] sm:$0xff]
  %v1347 = vld [vmem:[%s6 + $0x10] sm:$0xff]
  %v1348 = vld [vmem:[%s6 + $0x18] sm:$0xff]
  %v1349 = vld [vmem:[%s7] sm:$0x3]
  %v1350 = vadd.f32 %v1012, %v1014
  %v1351 = vadd.f32 %v1350, %v1017
  %v1352 = vadd.f32 %v1351, %v1019
  %v1353 = vadd.f32 %v1352, %v1022
  %v1354 = vadd.f32 %v1353, %v1024
  %v1355 = vadd.f32 %v1354, %v1027
  %v1356 = vadd.f32 %v1355, %v1029
  %v1357 = vadd.f32 %v1356, %v1032
  %v1358 = vadd.f32 %v1357, %v1034
  %v1359 = vadd.f32 %v1358, %v1037
  %v1360 = vadd.f32 %v1359, %v1039
  %v1361 = vadd.f32 %v1360, %v1042
  %v1362 = vadd.f32 %v1361, %v1044
  %v1363 = vadd.f32 %v1362, %v1047
  %v1364 = vadd.f32 %v1363, %v1049
  %v1365 = vrot.slane %v1364, 4
  %v1366 = vadd.f32 %v1364, %v1365
  %v1367 = vrot.slane %v1366, 2
  %v1368 = vadd.f32 %v1366, %v1367
  %v1369 = vrot.slane %v1368, 1
  %v1370 = vadd.f32 %v1368, %v1369
  %v1371 = vadd.f32 %v1110, %v1112
  %v1372 = vadd.f32 %v1371, %v1115
  %v1373 = vadd.f32 %v1372, %v1117
  %v1374 = vadd.f32 %v1373, %v1120
  %v1375 = vadd.f32 %v1374, %v1122
  %v1376 = vadd.f32 %v1375, %v1125
  %v1377 = vadd.f32 %v1376, %v1127
  %v1378 = vadd.f32 %v1377, %v1130
  %v1379 = vadd.f32 %v1378, %v1132
  %v1380 = vadd.f32 %v1379, %v1135
  %v1381 = vadd.f32 %v1380, %v1137
  %v1382 = vadd.f32 %v1381, %v1140
  %v1383 = vadd.f32 %v1382, %v1142
  %v1384 = vadd.f32 %v1383, %v1145
  %v1385 = vadd.f32 %v1384, %v1147
  %v1386 = vrot.slane %v1385, 4
  %v1387 = vadd.f32 %v1385, %v1386
  %v1388 = vrot.slane %v1387, 2
  %v1389 = vadd.f32 %v1387, %v1388
  %v1390 = vrot.slane %v1389, 1
  %v1391 = vadd.f32 %v1389, %v1390
  %v1392 = vadd.f32 %v1208, %v1210
  %v1393 = vadd.f32 %v1392, %v1213
  %v1394 = vadd.f32 %v1393, %v1215
  %v1395 = vadd.f32 %v1394, %v1218
  %v1396 = vadd.f32 %v1395, %v1220
  %v1397 = vadd.f32 %v1396, %v1223
  %v1398 = vadd.f32 %v1397, %v1225
  %v1399 = vadd.f32 %v1398, %v1228
  %v1400 = vadd.f32 %v1399, %v1230
  %v1401 = vadd.f32 %v1400, %v1233
  %v1402 = vadd.f32 %v1401, %v1235
  %v1403 = vadd.f32 %v1402, %v1238
  %v1404 = vadd.f32 %v1403, %v1240
  %v1405 = vadd.f32 %v1404, %v1243
  %v1406 = vadd.f32 %v1405, %v1245
  %v1407 = vrot.slane %v1406, 4
  %v1408 = vadd.f32 %v1406, %v1407
  %v1409 = vrot.slane %v1408, 2
  %v1410 = vadd.f32 %v1408, %v1409
  %v1411 = vrot.slane %v1410, 1
  %v1412 = vadd.f32 %v1410, %v1411
  %v1413 = vadd.f32 %v1306, %v1308
  %v1414 = vadd.f32 %v1413, %v1311
  %v1415 = vadd.f32 %v1414, %v1313
  %v1416 = vadd.f32 %v1415, %v1316
  %v1417 = vadd.f32 %v1416, %v1318
  %v1418 = vadd.f32 %v1417, %v1321
  %v1419 = vadd.f32 %v1418, %v1323
  %v1420 = vadd.f32 %v1419, %v1326
  %v1421 = vadd.f32 %v1420, %v1328
  %v1422 = vadd.f32 %v1421, %v1331
  %v1423 = vadd.f32 %v1422, %v1333
  %v1424 = vadd.f32 %v1423, %v1336
  %v1425 = vadd.f32 %v1424, %v1338
  %v1426 = vadd.f32 %v1425, %v1341
  %v1427 = vadd.f32 %v1426, %v1343
  %v1428 = vrot.slane %v1427, 4
  %v1429 = vadd.f32 %v1427, %v1428
  %v1430 = vrot.slane %v1429, 2
  %v1431 = vadd.f32 %v1429, %v1430
  %v1432 = vrot.slane %v1431, 1
  %v1433 = vadd.f32 %v1431, %v1432
  %v1434 = vmul.f32 %v1012, %v1012
  %v1435 = vmul.f32 %v1110, %v1110
  %v1436 = vmul.f32 %v1208, %v1208
  %v1437 = vmul.f32 %v1306, %v1306
  %v1438 = vmul.f32 %v1014, %v1014
  %v1439 = vmul.f32 %v1112, %v1112
  %v1440 = vmul.f32 %v1210, %v1210
  %v1441 = vmul.f32 %v1308, %v1308
  %v1442 = vmul.f32 %v1017, %v1017
  %v1443 = vmul.f32 %v1115, %v1115
  %v1444 = vmul.f32 %v1213, %v1213
  %v1445 = vmul.f32 %v1311, %v1311
  %v1446 = vmul.f32 %v1019, %v1019
  %v1447 = vmul.f32 %v1117, %v1117
  %v1448 = vmul.f32 %v1215, %v1215
  %v1449 = vmul.f32 %v1313, %v1313
  %v1450 = vmul.f32 %v1022, %v1022
  %v1451 = vmul.f32 %v1120, %v1120
  %v1452 = vmul.f32 %v1218, %v1218
  %v1453 = vmul.f32 %v1316, %v1316
  %v1454 = vmul.f32 %v1024, %v1024
  %v1455 = vmul.f32 %v1122, %v1122
  %v1456 = vmul.f32 %v1220, %v1220
  %v1457 = vmul.f32 %v1318, %v1318
  %v1458 = vmul.f32 %v1027, %v1027
  %v1459 = vmul.f32 %v1125, %v1125
  %v1460 = vmul.f32 %v1223, %v1223
  %v1461 = vmul.f32 %v1321, %v1321
  %v1462 = vmul.f32 %v1029, %v1029
  %v1463 = vmul.f32 %v1127, %v1127
  %v1464 = vmul.f32 %v1225, %v1225
  %v1465 = vmul.f32 %v1323, %v1323
  %v1466 = vmul.f32 %v1032, %v1032
  %v1467 = vmul.f32 %v1130, %v1130
  %v1468 = vmul.f32 %v1228, %v1228
  %v1469 = vmul.f32 %v1326, %v1326
  %v1470 = vmul.f32 %v1034, %v1034
  %v1471 = vmul.f32 %v1132, %v1132
  %v1472 = vmul.f32 %v1230, %v1230
  %v1473 = vmul.f32 %v1328, %v1328
  %v1474 = vmul.f32 %v1037, %v1037
  %v1475 = vmul.f32 %v1135, %v1135
  %v1476 = vmul.f32 %v1233, %v1233
  %v1477 = vmul.f32 %v1331, %v1331
  %v1478 = vmul.f32 %v1039, %v1039
  %v1479 = vmul.f32 %v1137, %v1137
  %v1480 = vmul.f32 %v1235, %v1235
  %v1481 = vmul.f32 %v1333, %v1333
  %v1482 = vmul.f32 %v1042, %v1042
  %v1483 = vmul.f32 %v1140, %v1140
  %v1484 = vmul.f32 %v1238, %v1238
  %v1485 = vmul.f32 %v1336, %v1336
  %v1486 = vmul.f32 %v1044, %v1044
  %v1487 = vmul.f32 %v1142, %v1142
  %v1488 = vmul.f32 %v1240, %v1240
  %v1489 = vmul.f32 %v1338, %v1338
  %v1490 = vmul.f32 %v1047, %v1047
  %v1491 = vmul.f32 %v1145, %v1145
  %v1492 = vmul.f32 %v1243, %v1243
  %v1493 = vmul.f32 %v1341, %v1341
  %v1494 = vmul.f32 %v1049, %v1049
  %v1495 = vmul.f32 %v1147, %v1147
  %v1496 = vmul.f32 %v1245, %v1245
  %v1497 = vmul.f32 %v1343, %v1343
  %v1498 = vadd.f32 %v1434, %v1438
  %v1499 = vadd.f32 %v1498, %v1442
  %v1500 = vadd.f32 %v1499, %v1446
  %v1501 = vadd.f32 %v1500, %v1450
  %v1502 = vadd.f32 %v1501, %v1454
  %v1503 = vadd.f32 %v1502, %v1458
  %v1504 = vadd.f32 %v1503, %v1462
  %v1505 = vadd.f32 %v1504, %v1466
  %v1506 = vadd.f32 %v1505, %v1470
  %v1507 = vadd.f32 %v1506, %v1474
  %v1508 = vadd.f32 %v1507, %v1478
  %v1509 = vadd.f32 %v1508, %v1482
  %v1510 = vadd.f32 %v1509, %v1486
  %v1511 = vadd.f32 %v1510, %v1490
  %v1512 = vadd.f32 %v1511, %v1494
  %v1513 = vrot.slane %v1512, 4
  %v1514 = vadd.f32 %v1512, %v1513
  %v1515 = vrot.slane %v1514, 2
  %v1516 = vadd.f32 %v1514, %v1515
  %v1517 = vrot.slane %v1516, 1
  %v1518 = vadd.f32 %v1516, %v1517
  %v1519 = vadd.f32 %v1435, %v1439
  %v1520 = vadd.f32 %v1519, %v1443
  %v1521 = vadd.f32 %v1520, %v1447
  %v1522 = vadd.f32 %v1521, %v1451
  %v1523 = vadd.f32 %v1522, %v1455
  %v1524 = vadd.f32 %v1523, %v1459
  %v1525 = vadd.f32 %v1524, %v1463
  %v1526 = vadd.f32 %v1525, %v1467
  %v1527 = vadd.f32 %v1526, %v1471
  %v1528 = vadd.f32 %v1527, %v1475
  %v1529 = vadd.f32 %v1528, %v1479
  %v1530 = vadd.f32 %v1529, %v1483
  %v1531 = vadd.f32 %v1530, %v1487
  %v1532 = vadd.f32 %v1531, %v1491
  %v1533 = vadd.f32 %v1532, %v1495
  %v1534 = vrot.slane %v1533, 4
  %v1535 = vadd.f32 %v1533, %v1534
  %v1536 = vrot.slane %v1535, 2
  %v1537 = vadd.f32 %v1535, %v1536
  %v1538 = vrot.slane %v1537, 1
  %v1539 = vadd.f32 %v1537, %v1538
  %v1540 = vadd.f32 %v1436, %v1440
  %v1541 = vadd.f32 %v1540, %v1444
  %v1542 = vadd.f32 %v1541, %v1448
  %v1543 = vadd.f32 %v1542, %v1452
  %v1544 = vadd.f32 %v1543, %v1456
  %v1545 = vadd.f32 %v1544, %v1460
  %v1546 = vadd.f32 %v1545, %v1464
  %v1547 = vadd.f32 %v1546, %v1468
  %v1548 = vadd.f32 %v1547, %v1472
  %v1549 = vadd.f32 %v1548, %v1476
  %v1550 = vadd.f32 %v1549, %v1480
  %v1551 = vadd.f32 %v1550, %v1484
  %v1552 = vadd.f32 %v1551, %v1488
  %v1553 = vadd.f32 %v1552, %v1492
  %v1554 = vadd.f32 %v1553, %v1496
  %v1555 = vrot.slane %v1554, 4
  %v1556 = vadd.f32 %v1554, %v1555
  %v1557 = vrot.slane %v1556, 2
  %v1558 = vadd.f32 %v1556, %v1557
  %v1559 = vrot.slane %v1558, 1
  %v1560 = vadd.f32 %v1558, %v1559
  %v1561 = vadd.f32 %v1437, %v1441
  %v1562 = vadd.f32 %v1561, %v1445
  %v1563 = vadd.f32 %v1562, %v1449
  %v1564 = vadd.f32 %v1563, %v1453
  %v1565 = vadd.f32 %v1564, %v1457
  %v1566 = vadd.f32 %v1565, %v1461
  %v1567 = vadd.f32 %v1566, %v1465
  %v1568 = vadd.f32 %v1567, %v1469
  %v1569 = vadd.f32 %v1568, %v1473
  %v1570 = vadd.f32 %v1569, %v1477
  %v1571 = vadd.f32 %v1570, %v1481
  %v1572 = vadd.f32 %v1571, %v1485
  %v1573 = vadd.f32 %v1572, %v1489
  %v1574 = vadd.f32 %v1573, %v1493
  %v1575 = vadd.f32 %v1574, %v1497
  %v1576 = vrot.slane %v1575, 4
  %v1577 = vadd.f32 %v1575, %v1576
  %v1578 = vrot.slane %v1577, 2
  %v1579 = vadd.f32 %v1577, %v1578
  %v1580 = vrot.slane %v1579, 1
  %v1581 = vadd.f32 %v1579, %v1580
  %v1582 = vsel %vm334, %v1370, %v1518
  %v1583 = vsel %vm334, %v1391, %v1539
  %v1584 = vsel %vm334, %v1412, %v1560
  %v1585 = vsel %vm334, %v1433, %v1581
  %1586 = vmatpush.xpose.msra.mxu0 0.0
  %1587 = vmatpush.xpose.msra.mxu0 0.0
  %1588 = vmatpush.xpose.msra.mxu0 0.0
  %1589 = vmatpush.xpose.msra.mxu0 0.0
  %1590 = vmatpush.xpose.msra.mxu0 0.0
  %1591 = vmatpush.xpose.msra.mxu0 0.0
  %1592 = vmatpush.xpose.msra.mxu0 0.0
  %1593 = vmatpush.xpose.msra.mxu0 0.0
  %1594 = vmatpush.xpose.msra.mxu0 0.0
  %1595 = vmatpush.xpose.msra.mxu0 0.0
  %1596 = vmatpush.xpose.msra.mxu0 0.0
  %1597 = vmatpush.xpose.msra.mxu0 0.0
  %1598 = vmatpush.xpose.msra.mxu0 0.0
  %1599 = vmatpush.xpose.msra.mxu0 0.0
  %1600 = vmatpush.xpose.msra.mxu0 0.0
  %1601 = vmatpush.xpose.msra.mxu0 %v1345
  %1602 = vmatmul.f32.gmra.mxu0 %v1582
  %v1603 = vpop.f32.mrf.mxu0
  %v1604 = vadd.f32 0.0, %v1603
  %1605 = vdwg.mxu0
  %1606 = vmatpush.xpose.msra.mxu0 0.0
  %1607 = vmatpush.xpose.msra.mxu0 0.0
  %1608 = vmatpush.xpose.msra.mxu0 0.0
  %1609 = vmatpush.xpose.msra.mxu0 0.0
  %1610 = vmatpush.xpose.msra.mxu0 0.0
  %1611 = vmatpush.xpose.msra.mxu0 0.0
  %1612 = vmatpush.xpose.msra.mxu0 0.0
  %1613 = vmatpush.xpose.msra.mxu0 0.0
  %1614 = vmatpush.xpose.msra.mxu0 0.0
  %1615 = vmatpush.xpose.msra.mxu0 0.0
  %1616 = vmatpush.xpose.msra.mxu0 0.0
  %1617 = vmatpush.xpose.msra.mxu0 0.0
  %1618 = vmatpush.xpose.msra.mxu0 0.0
  %1619 = vmatpush.xpose.msra.mxu0 0.0
  %1620 = vmatpush.xpose.msra.mxu0 0.0
  %1621 = vmatpush.xpose.msra.mxu0 %v1346
  %1622 = vmatmul.f32.gmra.mxu0 %v1583
  %v1623 = vpop.f32.mrf.mxu0
  %v1624 = vadd.f32 %v1604, %v1623
  %1625 = vdwg.mxu0
  %1626 = vmatpush.xpose.msra.mxu0 0.0
  %1627 = vmatpush.xpose.msra.mxu0 0.0
  %1628 = vmatpush.xpose.msra.mxu0 0.0
  %1629 = vmatpush.xpose.msra.mxu0 0.0
  %1630 = vmatpush.xpose.msra.mxu0 0.0
  %1631 = vmatpush.xpose.msra.mxu0 0.0
  %1632 = vmatpush.xpose.msra.mxu0 0.0
  %1633 = vmatpush.xpose.msra.mxu0 0.0
  %1634 = vmatpush.xpose.msra.mxu0 0.0
  %1635 = vmatpush.xpose.msra.mxu0 0.0
  %1636 = vmatpush.xpose.msra.mxu0 0.0
  %1637 = vmatpush.xpose.msra.mxu0 0.0
  %1638 = vmatpush.xpose.msra.mxu0 0.0
  %1639 = vmatpush.xpose.msra.mxu0 0.0
  %1640 = vmatpush.xpose.msra.mxu0 0.0
  %1641 = vmatpush.xpose.msra.mxu0 %v1347
  %1642 = vmatmul.f32.gmra.mxu0 %v1584
  %v1643 = vpop.f32.mrf.mxu0
  %v1644 = vadd.f32 %v1624, %v1643
  %1645 = vdwg.mxu0
  %1646 = vmatpush.xpose.msra.mxu0 0.0
  %1647 = vmatpush.xpose.msra.mxu0 0.0
  %1648 = vmatpush.xpose.msra.mxu0 0.0
  %1649 = vmatpush.xpose.msra.mxu0 0.0
  %1650 = vmatpush.xpose.msra.mxu0 0.0
  %1651 = vmatpush.xpose.msra.mxu0 0.0
  %1652 = vmatpush.xpose.msra.mxu0 0.0
  %1653 = vmatpush.xpose.msra.mxu0 0.0
  %1654 = vmatpush.xpose.msra.mxu0 0.0
  %1655 = vmatpush.xpose.msra.mxu0 0.0
  %1656 = vmatpush.xpose.msra.mxu0 0.0
  %1657 = vmatpush.xpose.msra.mxu0 0.0
  %1658 = vmatpush.xpose.msra.mxu0 0.0
  %1659 = vmatpush.xpose.msra.mxu0 0.0
  %1660 = vmatpush.xpose.msra.mxu0 0.0
  %1661 = vmatpush.xpose.msra.mxu0 %v1348
  %1662 = vmatmul.f32.gmra.mxu0 %v1585
  %v1663 = vpop.f32.mrf.mxu0
  %v1664 = vadd.f32 %v1644, %v1663
  %1665 = vdwg.mxu0
  %v1666 = vmul.f32 %v1664, 0.00012207031
  %v1667 = vmul.f32 %v1666, %v1666
  %v1669 = vrot.slane %v1667, 7
  %v1671 = vsub.f32 %v1666, %v1669
  %v1672 = vmax.f32 %v1671, 0.0
  %v1673 = vadd.f32 %v1672, 1e-05
  %v1674 = vrsqrt.pop %v1673
  %v1675 = vmul.f32 %v1674, %v1673
  %v1676 = vmul.f32 %v1675, %v1674
  %v1677 = vmul.f32 0.5, %v1676
  %v1678 = vsub.f32 1.5, %v1677
  %v1679 = vmul.f32 %v1674, %v1678
  %vm1680 = vweird.f32 %v1673
  %vm1681 = vweird.f32 %v1674
  %vm1682 = vmor %vm1680, %vm1681
  %v1683 = vsel %vm1682, %v1674, %v1679
  %v1685 = vrot.slane %v1683, 1
  %v1687 = vmul.f32 %v1349, %v1685
  %v1688 = vmul.f32 %v1666, %v1687
  %v1690 = vrot.slane %v1688, 7
  %v1692 = vsub.f32 %v1349, %v1690
  %v1693 = vsel %vm334, %v1687, %v1692
  %v1695 = vsel %vm83, %v1693, 0
  %1697 = vmatpush.msra.mxu0 0.0
  %1698 = vmatpush.msra.mxu0 0.0
  %1699 = vmatpush.msra.mxu0 0.0
  %1700 = vmatpush.msra.mxu0 0.0
  %1701 = vmatpush.msra.mxu0 0.0
  %1702 = vmatpush.msra.mxu0 0.0
  %1703 = vmatpush.msra.mxu0 0.0
  %1704 = vmatpush.msra.mxu0 0.0
  %1705 = vmatpush.msra.mxu0 0.0
  %1706 = vmatpush.msra.mxu0 0.0
  %1707 = vmatpush.msra.mxu0 0.0
  %1708 = vmatpush.msra.mxu0 0.0
  %1709 = vmatpush.msra.mxu0 0.0
  %1710 = vmatpush.msra.mxu0 0.0
  %1711 = vmatpush.msra.mxu0 0.0
  %1712 = vmatpush.msra.mxu0 %v1345
  %1713 = vmatmul.f32.gmra.mxu0 %v1695
  %v1714 = vpop.f32.mrf.mxu0
  %v1715 = vadd.f32 0.0, %v1714
  %1716 = vdwg.mxu0
  %1717 = vmatpush.msra.mxu0 0.0
  %1718 = vmatpush.msra.mxu0 0.0
  %1719 = vmatpush.msra.mxu0 0.0
  %1720 = vmatpush.msra.mxu0 0.0
  %1721 = vmatpush.msra.mxu0 0.0
  %1722 = vmatpush.msra.mxu0 0.0
  %1723 = vmatpush.msra.mxu0 0.0
  %1724 = vmatpush.msra.mxu0 0.0
  %1725 = vmatpush.msra.mxu0 0.0
  %1726 = vmatpush.msra.mxu0 0.0
  %1727 = vmatpush.msra.mxu0 0.0
  %1728 = vmatpush.msra.mxu0 0.0
  %1729 = vmatpush.msra.mxu0 0.0
  %1730 = vmatpush.msra.mxu0 0.0
  %1731 = vmatpush.msra.mxu0 0.0
  %1732 = vmatpush.msra.mxu0 %v1346
  %1733 = vmatmul.f32.gmra.mxu0 %v1695
  %v1734 = vpop.f32.mrf.mxu0
  %v1735 = vadd.f32 0.0, %v1734
  %1736 = vdwg.mxu0
  %1737 = vmatpush.msra.mxu0 0.0
  %1738 = vmatpush.msra.mxu0 0.0
  %1739 = vmatpush.msra.mxu0 0.0
  %1740 = vmatpush.msra.mxu0 0.0
  %1741 = vmatpush.msra.mxu0 0.0
  %1742 = vmatpush.msra.mxu0 0.0
  %1743 = vmatpush.msra.mxu0 0.0
  %1744 = vmatpush.msra.mxu0 0.0
  %1745 = vmatpush.msra.mxu0 0.0
  %1746 = vmatpush.msra.mxu0 0.0
  %1747 = vmatpush.msra.mxu0 0.0
  %1748 = vmatpush.msra.mxu0 0.0
  %1749 = vmatpush.msra.mxu0 0.0
  %1750 = vmatpush.msra.mxu0 0.0
  %1751 = vmatpush.msra.mxu0 0.0
  %1752 = vmatpush.msra.mxu0 %v1347
  %1753 = vmatmul.f32.gmra.mxu0 %v1695
  %v1754 = vpop.f32.mrf.mxu0
  %v1755 = vadd.f32 0.0, %v1754
  %1756 = vdwg.mxu0
  %1757 = vmatpush.msra.mxu0 0.0
  %1758 = vmatpush.msra.mxu0 0.0
  %1759 = vmatpush.msra.mxu0 0.0
  %1760 = vmatpush.msra.mxu0 0.0
  %1761 = vmatpush.msra.mxu0 0.0
  %1762 = vmatpush.msra.mxu0 0.0
  %1763 = vmatpush.msra.mxu0 0.0
  %1764 = vmatpush.msra.mxu0 0.0
  %1765 = vmatpush.msra.mxu0 0.0
  %1766 = vmatpush.msra.mxu0 0.0
  %1767 = vmatpush.msra.mxu0 0.0
  %1768 = vmatpush.msra.mxu0 0.0
  %1769 = vmatpush.msra.mxu0 0.0
  %1770 = vmatpush.msra.mxu0 0.0
  %1771 = vmatpush.msra.mxu0 0.0
  %1772 = vmatpush.msra.mxu0 %v1348
  %1773 = vmatmul.f32.gmra.mxu0 %v1695
  %v1774 = vpop.f32.mrf.mxu0
  %v1775 = vadd.f32 0.0, %v1774
  %1776 = vdwg.mxu0
  %v1777 = vperm.slane %v1715, 0
  %v1778 = vperm.slane %v1735, 0
  %v1779 = vperm.slane %v1755, 0
  %v1780 = vperm.slane %v1775, 0
  %v1781 = vmul.f32 %v1012, %v1777
  %v1782 = vmul.f32 %v1110, %v1778
  %v1783 = vmul.f32 %v1208, %v1779
  %v1784 = vmul.f32 %v1306, %v1780
  %v1785 = vmul.f32 %v1014, %v1777
  %v1786 = vmul.f32 %v1112, %v1778
  %v1787 = vmul.f32 %v1210, %v1779
  %v1788 = vmul.f32 %v1308, %v1780
  %v1789 = vmul.f32 %v1017, %v1777
  %v1790 = vmul.f32 %v1115, %v1778
  %v1791 = vmul.f32 %v1213, %v1779
  %v1792 = vmul.f32 %v1311, %v1780
  %v1793 = vmul.f32 %v1019, %v1777
  %v1794 = vmul.f32 %v1117, %v1778
  %v1795 = vmul.f32 %v1215, %v1779
  %v1796 = vmul.f32 %v1313, %v1780
  %v1797 = vmul.f32 %v1022, %v1777
  %v1798 = vmul.f32 %v1120, %v1778
  %v1799 = vmul.f32 %v1218, %v1779
  %v1800 = vmul.f32 %v1316, %v1780
  %v1801 = vmul.f32 %v1024, %v1777
  %v1802 = vmul.f32 %v1122, %v1778
  %v1803 = vmul.f32 %v1220, %v1779
  %v1804 = vmul.f32 %v1318, %v1780
  %v1805 = vmul.f32 %v1027, %v1777
  %v1806 = vmul.f32 %v1125, %v1778
  %v1807 = vmul.f32 %v1223, %v1779
  %v1808 = vmul.f32 %v1321, %v1780
  %v1809 = vmul.f32 %v1029, %v1777
  %v1810 = vmul.f32 %v1127, %v1778
  %v1811 = vmul.f32 %v1225, %v1779
  %v1812 = vmul.f32 %v1323, %v1780
  %v1813 = vmul.f32 %v1032, %v1777
  %v1814 = vmul.f32 %v1130, %v1778
  %v1815 = vmul.f32 %v1228, %v1779
  %v1816 = vmul.f32 %v1326, %v1780
  %v1817 = vmul.f32 %v1034, %v1777
  %v1818 = vmul.f32 %v1132, %v1778
  %v1819 = vmul.f32 %v1230, %v1779
  %v1820 = vmul.f32 %v1328, %v1780
  %v1821 = vmul.f32 %v1037, %v1777
  %v1822 = vmul.f32 %v1135, %v1778
  %v1823 = vmul.f32 %v1233, %v1779
  %v1824 = vmul.f32 %v1331, %v1780
  %v1825 = vmul.f32 %v1039, %v1777
  %v1826 = vmul.f32 %v1137, %v1778
  %v1827 = vmul.f32 %v1235, %v1779
  %v1828 = vmul.f32 %v1333, %v1780
  %v1829 = vmul.f32 %v1042, %v1777
  %v1830 = vmul.f32 %v1140, %v1778
  %v1831 = vmul.f32 %v1238, %v1779
  %v1832 = vmul.f32 %v1336, %v1780
  %v1833 = vmul.f32 %v1044, %v1777
  %v1834 = vmul.f32 %v1142, %v1778
  %v1835 = vmul.f32 %v1240, %v1779
  %v1836 = vmul.f32 %v1338, %v1780
  %v1837 = vmul.f32 %v1047, %v1777
  %v1838 = vmul.f32 %v1145, %v1778
  %v1839 = vmul.f32 %v1243, %v1779
  %v1840 = vmul.f32 %v1341, %v1780
  %v1841 = vmul.f32 %v1049, %v1777
  %v1842 = vmul.f32 %v1147, %v1778
  %v1843 = vmul.f32 %v1245, %v1779
  %v1844 = vmul.f32 %v1343, %v1780
  %v1845 = vperm.slane %v1715, 1
  %v1846 = vperm.slane %v1735, 1
  %v1847 = vperm.slane %v1755, 1
  %v1848 = vperm.slane %v1775, 1
  %v1849 = vadd.f32 %v1781, %v1845
  %v1850 = vadd.f32 %v1782, %v1846
  %v1851 = vadd.f32 %v1783, %v1847
  %v1852 = vadd.f32 %v1784, %v1848
  %v1853 = vadd.f32 %v1785, %v1845
  %v1854 = vadd.f32 %v1786, %v1846
  %v1855 = vadd.f32 %v1787, %v1847
  %v1856 = vadd.f32 %v1788, %v1848
  %v1857 = vadd.f32 %v1789, %v1845
  %v1858 = vadd.f32 %v1790, %v1846
  %v1859 = vadd.f32 %v1791, %v1847
  %v1860 = vadd.f32 %v1792, %v1848
  %v1861 = vadd.f32 %v1793, %v1845
  %v1862 = vadd.f32 %v1794, %v1846
  %v1863 = vadd.f32 %v1795, %v1847
  %v1864 = vadd.f32 %v1796, %v1848
  %v1865 = vadd.f32 %v1797, %v1845
  %v1866 = vadd.f32 %v1798, %v1846
  %v1867 = vadd.f32 %v1799, %v1847
  %v1868 = vadd.f32 %v1800, %v1848
  %v1869 = vadd.f32 %v1801, %v1845
  %v1870 = vadd.f32 %v1802, %v1846
  %v1871 = vadd.f32 %v1803, %v1847
  %v1872 = vadd.f32 %v1804, %v1848
  %v1873 = vadd.f32 %v1805, %v1845
  %v1874 = vadd.f32 %v1806, %v1846
  %v1875 = vadd.f32 %v1807, %v1847
  %v1876 = vadd.f32 %v1808, %v1848
  %v1877 = vadd.f32 %v1809, %v1845
  %v1878 = vadd.f32 %v1810, %v1846
  %v1879 = vadd.f32 %v1811, %v1847
  %v1880 = vadd.f32 %v1812, %v1848
  %v1881 = vadd.f32 %v1813, %v1845
  %v1882 = vadd.f32 %v1814, %v1846
  %v1883 = vadd.f32 %v1815, %v1847
  %v1884 = vadd.f32 %v1816, %v1848
  %v1885 = vadd.f32 %v1817, %v1845
  %v1886 = vadd.f32 %v1818, %v1846
  %v1887 = vadd.f32 %v1819, %v1847
  %v1888 = vadd.f32 %v1820, %v1848
  %v1889 = vadd.f32 %v1821, %v1845
  %v1890 = vadd.f32 %v1822, %v1846
  %v1891 = vadd.f32 %v1823, %v1847
  %v1892 = vadd.f32 %v1824, %v1848
  %v1893 = vadd.f32 %v1825, %v1845
  %v1894 = vadd.f32 %v1826, %v1846
  %v1895 = vadd.f32 %v1827, %v1847
  %v1896 = vadd.f32 %v1828, %v1848
  %v1897 = vadd.f32 %v1829, %v1845
  %v1898 = vadd.f32 %v1830, %v1846
  %v1899 = vadd.f32 %v1831, %v1847
  %v1900 = vadd.f32 %v1832, %v1848
  %v1901 = vadd.f32 %v1833, %v1845
  %v1902 = vadd.f32 %v1834, %v1846
  %v1903 = vadd.f32 %v1835, %v1847
  %v1904 = vadd.f32 %v1836, %v1848
  %v1905 = vadd.f32 %v1837, %v1845
  %v1906 = vadd.f32 %v1838, %v1846
  %v1907 = vadd.f32 %v1839, %v1847
  %v1908 = vadd.f32 %v1840, %v1848
  %v1909 = vadd.f32 %v1841, %v1845
  %v1910 = vadd.f32 %v1842, %v1846
  %v1911 = vadd.f32 %v1843, %v1847
  %v1912 = vadd.f32 %v1844, %v1848
  %v1913 = vmax.f32 %v1849, 0.0
  %v1914 = vmax.f32 %v1850, 0.0
  %v1915 = vmax.f32 %v1851, 0.0
  %v1916 = vmax.f32 %v1852, 0.0
  %v1917 = vmax.f32 %v1853, 0.0
  %v1918 = vmax.f32 %v1854, 0.0
  %v1919 = vmax.f32 %v1855, 0.0
  %v1920 = vmax.f32 %v1856, 0.0
  %v1921 = vmax.f32 %v1857, 0.0
  %v1922 = vmax.f32 %v1858, 0.0
  %v1923 = vmax.f32 %v1859, 0.0
  %v1924 = vmax.f32 %v1860, 0.0
  %v1925 = vmax.f32 %v1861, 0.0
  %v1926 = vmax.f32 %v1862, 0.0
  %v1927 = vmax.f32 %v1863, 0.0
  %v1928 = vmax.f32 %v1864, 0.0
  %v1929 = vmax.f32 %v1865, 0.0
  %v1930 = vmax.f32 %v1866, 0.0
  %v1931 = vmax.f32 %v1867, 0.0
  %v1932 = vmax.f32 %v1868, 0.0
  %v1933 = vmax.f32 %v1869, 0.0
  %v1934 = vmax.f32 %v1870, 0.0
  %v1935 = vmax.f32 %v1871, 0.0
  %v1936 = vmax.f32 %v1872, 0.0
  %v1937 = vmax.f32 %v1873, 0.0
  %v1938 = vmax.f32 %v1874, 0.0
  %v1939 = vmax.f32 %v1875, 0.0
  %v1940 = vmax.f32 %v1876, 0.0
  %v1941 = vmax.f32 %v1877, 0.0
  %v1942 = vmax.f32 %v1878, 0.0
  %v1943 = vmax.f32 %v1879, 0.0
  %v1944 = vmax.f32 %v1880, 0.0
  %v1945 = vmax.f32 %v1881, 0.0
  %v1946 = vmax.f32 %v1882, 0.0
  %v1947 = vmax.f32 %v1883, 0.0
  %v1948 = vmax.f32 %v1884, 0.0
  %v1949 = vmax.f32 %v1885, 0.0
  %v1950 = vmax.f32 %v1886, 0.0
  %v1951 = vmax.f32 %v1887, 0.0
  %v1952 = vmax.f32 %v1888, 0.0
  %v1953 = vmax.f32 %v1889, 0.0
  %v1954 = vmax.f32 %v1890, 0.0
  %v1955 = vmax.f32 %v1891, 0.0
  %v1956 = vmax.f32 %v1892, 0.0
  %v1957 = vmax.f32 %v1893, 0.0
  %v1958 = vmax.f32 %v1894, 0.0
  %v1959 = vmax.f32 %v1895, 0.0
  %v1960 = vmax.f32 %v1896, 0.0
  %v1961 = vmax.f32 %v1897, 0.0
  %v1962 = vmax.f32 %v1898, 0.0
  %v1963 = vmax.f32 %v1899, 0.0
  %v1964 = vmax.f32 %v1900, 0.0
  %v1965 = vmax.f32 %v1901, 0.0
  %v1966 = vmax.f32 %v1902, 0.0
  %v1967 = vmax.f32 %v1903, 0.0
  %v1968 = vmax.f32 %v1904, 0.0
  %v1969 = vmax.f32 %v1905, 0.0
  %v1970 = vmax.f32 %v1906, 0.0
  %v1971 = vmax.f32 %v1907, 0.0
  %v1972 = vmax.f32 %v1908, 0.0
  %v1973 = vmax.f32 %v1909, 0.0
  %v1974 = vmax.f32 %v1910, 0.0
  %v1975 = vmax.f32 %v1911, 0.0
  %v1976 = vmax.f32 %v1912, 0.0
  %s1977 = smul.u32 4, 64
  %s1978 = smul.u32 %s1977, 2
  %s1979 = sshll.u32 %s1978, 4
  %1980 = dma.done %s39, %s1979
  %v1981 = vpack.c.bf16 %v1917, %v1913
  %v1982 = vpack.c.bf16 %v1918, %v1914
  %v1983 = vpack.c.bf16 %v1919, %v1915
  %v1984 = vpack.c.bf16 %v1920, %v1916
  %v1985 = vpack.c.bf16 %v1925, %v1921
  %v1986 = vpack.c.bf16 %v1926, %v1922
  %v1987 = vpack.c.bf16 %v1927, %v1923
  %v1988 = vpack.c.bf16 %v1928, %v1924
  %v1989 = vpack.c.bf16 %v1933, %v1929
  %v1990 = vpack.c.bf16 %v1934, %v1930
  %v1991 = vpack.c.bf16 %v1935, %v1931
  %v1992 = vpack.c.bf16 %v1936, %v1932
  %v1993 = vpack.c.bf16 %v1941, %v1937
  %v1994 = vpack.c.bf16 %v1942, %v1938
  %v1995 = vpack.c.bf16 %v1943, %v1939
  %v1996 = vpack.c.bf16 %v1944, %v1940
  %v1997 = vpack.c.bf16 %v1949, %v1945
  %v1998 = vpack.c.bf16 %v1950, %v1946
  %v1999 = vpack.c.bf16 %v1951, %v1947
  %v2000 = vpack.c.bf16 %v1952, %v1948
  %v2001 = vpack.c.bf16 %v1957, %v1953
  %v2002 = vpack.c.bf16 %v1958, %v1954
  %v2003 = vpack.c.bf16 %v1959, %v1955
  %v2004 = vpack.c.bf16 %v1960, %v1956
  %v2005 = vpack.c.bf16 %v1965, %v1961
  %v2006 = vpack.c.bf16 %v1966, %v1962
  %v2007 = vpack.c.bf16 %v1967, %v1963
  %v2008 = vpack.c.bf16 %v1968, %v1964
  %v2009 = vpack.c.bf16 %v1973, %v1969
  %v2010 = vpack.c.bf16 %v1974, %v1970
  %v2011 = vpack.c.bf16 %v1975, %v1971
  %v2012 = vpack.c.bf16 %v1976, %v1972
  %v2013 = vld [vmem:[#allocation3] sm:$0xff]
  %v2014 = vld [vmem:[#allocation3 + $0x8] sm:$0xff]
  %v2015 = vld [vmem:[#allocation3 + $0x10] sm:$0xff]
  %v2016 = vld [vmem:[#allocation3 + $0x18] sm:$0xff]
  %v2017 = vld [vmem:[#allocation3 + $0x20] sm:$0xff]
  %v2018 = vld [vmem:[#allocation3 + $0x28] sm:$0xff]
  %v2019 = vld [vmem:[#allocation3 + $0x30] sm:$0xff]
  %v2020 = vld [vmem:[#allocation3 + $0x38] sm:$0xff]
  %v2021 = vld [vmem:[#allocation3 + $0x40] sm:$0xff]
  %v2022 = vld [vmem:[#allocation3 + $0x48] sm:$0xff]
  %v2023 = vld [vmem:[#allocation3 + $0x50] sm:$0xff]
  %v2024 = vld [vmem:[#allocation3 + $0x58] sm:$0xff]
  %v2025 = vld [vmem:[#allocation3 + $0x60] sm:$0xff]
  %v2026 = vld [vmem:[#allocation3 + $0x68] sm:$0xff]
  %v2027 = vld [vmem:[#allocation3 + $0x70] sm:$0xff]
  %v2028 = vld [vmem:[#allocation3 + $0x78] sm:$0xff]
  %v2029 = vld [vmem:[#allocation3 + $0x80] sm:$0xff]
  %v2030 = vld [vmem:[#allocation3 + $0x88] sm:$0xff]
  %v2031 = vld [vmem:[#allocation3 + $0x90] sm:$0xff]
  %v2032 = vld [vmem:[#allocation3 + $0x98] sm:$0xff]
  %v2033 = vld [vmem:[#allocation3 + $0xa0] sm:$0xff]
  %v2034 = vld [vmem:[#allocation3 + $0xa8] sm:$0xff]
  %v2035 = vld [vmem:[#allocation3 + $0xb0] sm:$0xff]
  %v2036 = vld [vmem:[#allocation3 + $0xb8] sm:$0xff]
  %v2037 = vld [vmem:[#allocation3 + $0xc0] sm:$0xff]
  %v2038 = vld [vmem:[#allocation3 + $0xc8] sm:$0xff]
  %v2039 = vld [vmem:[#allocation3 + $0xd0] sm:$0xff]
  %v2040 = vld [vmem:[#allocation3 + $0xd8] sm:$0xff]
  %v2041 = vld [vmem:[#allocation3 + $0xe0] sm:$0xff]
  %v2042 = vld [vmem:[#allocation3 + $0xe8] sm:$0xff]
  %v2043 = vld [vmem:[#allocation3 + $0xf0] sm:$0xff]
  %v2044 = vld [vmem:[#allocation3 + $0xf8] sm:$0xff]
  %v2045 = vld [vmem:[#allocation3 + $0x100] sm:$0xff]
  %v2046 = vld [vmem:[#allocation3 + $0x108] sm:$0xff]
  %v2047 = vld [vmem:[#allocation3 + $0x110] sm:$0xff]
  %v2048 = vld [vmem:[#allocation3 + $0x118] sm:$0xff]
  %v2049 = vld [vmem:[#allocation3 + $0x120] sm:$0xff]
  %v2050 = vld [vmem:[#allocation3 + $0x128] sm:$0xff]
  %v2051 = vld [vmem:[#allocation3 + $0x130] sm:$0xff]
  %v2052 = vld [vmem:[#allocation3 + $0x138] sm:$0xff]
  %v2053 = vld [vmem:[#allocation3 + $0x140] sm:$0xff]
  %v2054 = vld [vmem:[#allocation3 + $0x148] sm:$0xff]
  %v2055 = vld [vmem:[#allocation3 + $0x150] sm:$0xff]
  %v2056 = vld [vmem:[#allocation3 + $0x158] sm:$0xff]
  %v2057 = vld [vmem:[#allocation3 + $0x160] sm:$0xff]
  %v2058 = vld [vmem:[#allocation3 + $0x168] sm:$0xff]
  %v2059 = vld [vmem:[#allocation3 + $0x170] sm:$0xff]
  %v2060 = vld [vmem:[#allocation3 + $0x178] sm:$0xff]
  %v2061 = vld [vmem:[#allocation3 + $0x180] sm:$0xff]
  %v2062 = vld [vmem:[#allocation3 + $0x188] sm:$0xff]
  %v2063 = vld [vmem:[#allocation3 + $0x190] sm:$0xff]
  %v2064 = vld [vmem:[#allocation3 + $0x198] sm:$0xff]
  %v2065 = vld [vmem:[#allocation3 + $0x1a0] sm:$0xff]
  %v2066 = vld [vmem:[#allocation3 + $0x1a8] sm:$0xff]
  %v2067 = vld [vmem:[#allocation3 + $0x1b0] sm:$0xff]
  %v2068 = vld [vmem:[#allocation3 + $0x1b8] sm:$0xff]
  %v2069 = vld [vmem:[#allocation3 + $0x1c0] sm:$0xff]
  %v2070 = vld [vmem:[#allocation3 + $0x1c8] sm:$0xff]
  %v2071 = vld [vmem:[#allocation3 + $0x1d0] sm:$0xff]
  %v2072 = vld [vmem:[#allocation3 + $0x1d8] sm:$0xff]
  %v2073 = vld [vmem:[#allocation3 + $0x1e0] sm:$0xff]
  %v2074 = vld [vmem:[#allocation3 + $0x1e8] sm:$0xff]
  %v2075 = vld [vmem:[#allocation3 + $0x1f0] sm:$0xff]
  %v2076 = vld [vmem:[#allocation3 + $0x1f8] sm:$0xff]
  %v2141 = vunpack.c.l.b16 %v2013
  %v2142 = vunpack.c.h.b16 %v2013
  %v2143 = vunpack.c.l.b16 %v2014
  %v2144 = vunpack.c.h.b16 %v2014
  %v2145 = vunpack.c.l.b16 %v2015
  %v2146 = vunpack.c.h.b16 %v2015
  %v2147 = vunpack.c.l.b16 %v2016
  %v2148 = vunpack.c.h.b16 %v2016
  %v2149 = vunpack.c.l.b16 %v2017
  %v2150 = vunpack.c.h.b16 %v2017
  %v2151 = vunpack.c.l.b16 %v2018
  %v2152 = vunpack.c.h.b16 %v2018
  %v2153 = vunpack.c.l.b16 %v2019
  %v2154 = vunpack.c.h.b16 %v2019
  %v2155 = vunpack.c.l.b16 %v2020
  %v2156 = vunpack.c.h.b16 %v2020
  %v2157 = vunpack.c.l.b16 %v2021
  %v2158 = vunpack.c.h.b16 %v2021
  %v2159 = vunpack.c.l.b16 %v2022
  %v2160 = vunpack.c.h.b16 %v2022
  %v2161 = vunpack.c.l.b16 %v2023
  %v2162 = vunpack.c.h.b16 %v2023
  %v2163 = vunpack.c.l.b16 %v2024
  %v2164 = vunpack.c.h.b16 %v2024
  %v2165 = vunpack.c.l.b16 %v2025
  %v2166 = vunpack.c.h.b16 %v2025
  %v2167 = vunpack.c.l.b16 %v2026
  %v2168 = vunpack.c.h.b16 %v2026
  %v2169 = vunpack.c.l.b16 %v2027
  %v2170 = vunpack.c.h.b16 %v2027
  %v2171 = vunpack.c.l.b16 %v2028
  %v2172 = vunpack.c.h.b16 %v2028
  %v2173 = vunpack.c.l.b16 %v2029
  %v2174 = vunpack.c.h.b16 %v2029
  %v2175 = vunpack.c.l.b16 %v2030
  %v2176 = vunpack.c.h.b16 %v2030
  %v2177 = vunpack.c.l.b16 %v2031
  %v2178 = vunpack.c.h.b16 %v2031
  %v2179 = vunpack.c.l.b16 %v2032
  %v2180 = vunpack.c.h.b16 %v2032
  %v2181 = vunpack.c.l.b16 %v2033
  %v2182 = vunpack.c.h.b16 %v2033
  %v2183 = vunpack.c.l.b16 %v2034
  %v2184 = vunpack.c.h.b16 %v2034
  %v2185 = vunpack.c.l.b16 %v2035
  %v2186 = vunpack.c.h.b16 %v2035
  %v2187 = vunpack.c.l.b16 %v2036
  %v2188 = vunpack.c.h.b16 %v2036
  %v2189 = vunpack.c.l.b16 %v2037
  %v2190 = vunpack.c.h.b16 %v2037
  %v2191 = vunpack.c.l.b16 %v2038
  %v2192 = vunpack.c.h.b16 %v2038
  %v2193 = vunpack.c.l.b16 %v2039
  %v2194 = vunpack.c.h.b16 %v2039
  %v2195 = vunpack.c.l.b16 %v2040
  %v2196 = vunpack.c.h.b16 %v2040
  %v2197 = vunpack.c.l.b16 %v2041
  %v2198 = vunpack.c.h.b16 %v2041
  %v2199 = vunpack.c.l.b16 %v2042
  %v2200 = vunpack.c.h.b16 %v2042
  %v2201 = vunpack.c.l.b16 %v2043
  %v2202 = vunpack.c.h.b16 %v2043
  %v2203 = vunpack.c.l.b16 %v2044
  %v2204 = vunpack.c.h.b16 %v2044
  %v2205 = vunpack.c.l.b16 %v2045
  %v2206 = vunpack.c.h.b16 %v2045
  %v2207 = vunpack.c.l.b16 %v2046
  %v2208 = vunpack.c.h.b16 %v2046
  %v2209 = vunpack.c.l.b16 %v2047
  %v2210 = vunpack.c.h.b16 %v2047
  %v2211 = vunpack.c.l.b16 %v2048
  %v2212 = vunpack.c.h.b16 %v2048
  %v2213 = vunpack.c.l.b16 %v2049
  %v2214 = vunpack.c.h.b16 %v2049
  %v2215 = vunpack.c.l.b16 %v2050
  %v2216 = vunpack.c.h.b16 %v2050
  %v2217 = vunpack.c.l.b16 %v2051
  %v2218 = vunpack.c.h.b16 %v2051
  %v2219 = vunpack.c.l.b16 %v2052
  %v2220 = vunpack.c.h.b16 %v2052
  %v2221 = vunpack.c.l.b16 %v2053
  %v2222 = vunpack.c.h.b16 %v2053
  %v2223 = vunpack.c.l.b16 %v2054
  %v2224 = vunpack.c.h.b16 %v2054
  %v2225 = vunpack.c.l.b16 %v2055
  %v2226 = vunpack.c.h.b16 %v2055
  %v2227 = vunpack.c.l.b16 %v2056
  %v2228 = vunpack.c.h.b16 %v2056
  %v2229 = vunpack.c.l.b16 %v2057
  %v2230 = vunpack.c.h.b16 %v2057
  %v2231 = vunpack.c.l.b16 %v2058
  %v2232 = vunpack.c.h.b16 %v2058
  %v2233 = vunpack.c.l.b16 %v2059
  %v2234 = vunpack.c.h.b16 %v2059
  %v2235 = vunpack.c.l.b16 %v2060
  %v2236 = vunpack.c.h.b16 %v2060
  %v2237 = vunpack.c.l.b16 %v2061
  %v2238 = vunpack.c.h.b16 %v2061
  %v2239 = vunpack.c.l.b16 %v2062
  %v2240 = vunpack.c.h.b16 %v2062
  %v2241 = vunpack.c.l.b16 %v2063
  %v2242 = vunpack.c.h.b16 %v2063
  %v2243 = vunpack.c.l.b16 %v2064
  %v2244 = vunpack.c.h.b16 %v2064
  %v2245 = vunpack.c.l.b16 %v2065
  %v2246 = vunpack.c.h.b16 %v2065
  %v2247 = vunpack.c.l.b16 %v2066
  %v2248 = vunpack.c.h.b16 %v2066
  %v2249 = vunpack.c.l.b16 %v2067
  %v2250 = vunpack.c.h.b16 %v2067
  %v2251 = vunpack.c.l.b16 %v2068
  %v2252 = vunpack.c.h.b16 %v2068
  %v2253 = vunpack.c.l.b16 %v2069
  %v2254 = vunpack.c.h.b16 %v2069
  %v2255 = vunpack.c.l.b16 %v2070
  %v2256 = vunpack.c.h.b16 %v2070
  %v2257 = vunpack.c.l.b16 %v2071
  %v2258 = vunpack.c.h.b16 %v2071
  %v2259 = vunpack.c.l.b16 %v2072
  %v2260 = vunpack.c.h.b16 %v2072
  %v2261 = vunpack.c.l.b16 %v2073
  %v2262 = vunpack.c.h.b16 %v2073
  %v2263 = vunpack.c.l.b16 %v2074
  %v2264 = vunpack.c.h.b16 %v2074
  %v2265 = vunpack.c.l.b16 %v2075
  %v2266 = vunpack.c.h.b16 %v2075
  %v2267 = vunpack.c.l.b16 %v2076
  %v2268 = vunpack.c.h.b16 %v2076
  %v2269 = vpack.c.b16 %v2143, %v2141
  %v2270 = vpack.c.b16 %v2144, %v2142
  %v2271 = vpack.c.b16 %v2147, %v2145
  %v2272 = vpack.c.b16 %v2148, %v2146
  %v2273 = vpack.c.b16 %v2151, %v2149
  %v2274 = vpack.c.b16 %v2152, %v2150
  %v2275 = vpack.c.b16 %v2155, %v2153
  %v2276 = vpack.c.b16 %v2156, %v2154
  %v2277 = vpack.c.b16 %v2159, %v2157
  %v2278 = vpack.c.b16 %v2160, %v2158
  %v2279 = vpack.c.b16 %v2163, %v2161
  %v2280 = vpack.c.b16 %v2164, %v2162
  %v2281 = vpack.c.b16 %v2167, %v2165
  %v2282 = vpack.c.b16 %v2168, %v2166
  %v2283 = vpack.c.b16 %v2171, %v2169
  %v2284 = vpack.c.b16 %v2172, %v2170
  %v2285 = vpack.c.b16 %v2175, %v2173
  %v2286 = vpack.c.b16 %v2176, %v2174
  %v2287 = vpack.c.b16 %v2179, %v2177
  %v2288 = vpack.c.b16 %v2180, %v2178
  %v2289 = vpack.c.b16 %v2183, %v2181
  %v2290 = vpack.c.b16 %v2184, %v2182
  %v2291 = vpack.c.b16 %v2187, %v2185
  %v2292 = vpack.c.b16 %v2188, %v2186
  %v2293 = vpack.c.b16 %v2191, %v2189
  %v2294 = vpack.c.b16 %v2192, %v2190
  %v2295 = vpack.c.b16 %v2195, %v2193
  %v2296 = vpack.c.b16 %v2196, %v2194
  %v2297 = vpack.c.b16 %v2199, %v2197
  %v2298 = vpack.c.b16 %v2200, %v2198
  %v2299 = vpack.c.b16 %v2203, %v2201
  %v2300 = vpack.c.b16 %v2204, %v2202
  %v2301 = vpack.c.b16 %v2207, %v2205
  %v2302 = vpack.c.b16 %v2208, %v2206
  %v2303 = vpack.c.b16 %v2211, %v2209
  %v2304 = vpack.c.b16 %v2212, %v2210
  %v2305 = vpack.c.b16 %v2215, %v2213
  %v2306 = vpack.c.b16 %v2216, %v2214
  %v2307 = vpack.c.b16 %v2219, %v2217
  %v2308 = vpack.c.b16 %v2220, %v2218
  %v2309 = vpack.c.b16 %v2223, %v2221
  %v2310 = vpack.c.b16 %v2224, %v2222
  %v2311 = vpack.c.b16 %v2227, %v2225
  %v2312 = vpack.c.b16 %v2228, %v2226
  %v2313 = vpack.c.b16 %v2231, %v2229
  %v2314 = vpack.c.b16 %v2232, %v2230
  %v2315 = vpack.c.b16 %v2235, %v2233
  %v2316 = vpack.c.b16 %v2236, %v2234
  %v2317 = vpack.c.b16 %v2239, %v2237
  %v2318 = vpack.c.b16 %v2240, %v2238
  %v2319 = vpack.c.b16 %v2243, %v2241
  %v2320 = vpack.c.b16 %v2244, %v2242
  %v2321 = vpack.c.b16 %v2247, %v2245
  %v2322 = vpack.c.b16 %v2248, %v2246
  %v2323 = vpack.c.b16 %v2251, %v2249
  %v2324 = vpack.c.b16 %v2252, %v2250
  %v2325 = vpack.c.b16 %v2255, %v2253
  %v2326 = vpack.c.b16 %v2256, %v2254
  %v2327 = vpack.c.b16 %v2259, %v2257
  %v2328 = vpack.c.b16 %v2260, %v2258
  %v2329 = vpack.c.b16 %v2263, %v2261
  %v2330 = vpack.c.b16 %v2264, %v2262
  %v2331 = vpack.c.b16 %v2267, %v2265
  %v2332 = vpack.c.b16 %v2268, %v2266
  %2397 = vmatpush.bf16.msra.mxu0 %v2283
  %2398 = vmatpush.bf16.msra.mxu0 %v2281
  %2399 = vmatpush.bf16.msra.mxu0 %v2279
  %2400 = vmatpush.bf16.msra.mxu0 %v2277
  %2401 = vmatpush.bf16.msra.mxu0 %v2275
  %2402 = vmatpush.bf16.msra.mxu0 %v2273
  %2403 = vmatpush.bf16.msra.mxu0 %v2271
  %2404 = vmatpush.bf16.msra.mxu0 %v2269
  %2405 = vmatmul.bf16.gmra.mxu0 %v1981
  %v2406 = vpop.f32.mrf.mxu0
  %v2407 = vadd.f32 0.0, %v2406
  %v2408 = vpop.f32.mrf.mxu0
  %v2409 = vadd.f32 0.0, %v2408
  %2410 = vmatmul.bf16.gmra.mxu0 %v1985
  %v2411 = vpop.f32.mrf.mxu0
  %v2412 = vadd.f32 0.0, %v2411
  %v2413 = vpop.f32.mrf.mxu0
  %v2414 = vadd.f32 0.0, %v2413
  %2415 = vmatmul.bf16.gmra.mxu0 %v1989
  %v2416 = vpop.f32.mrf.mxu0
  %v2417 = vadd.f32 0.0, %v2416
  %v2418 = vpop.f32.mrf.mxu0
  %v2419 = vadd.f32 0.0, %v2418
  %2420 = vmatmul.bf16.gmra.mxu0 %v1993
  %v2421 = vpop.f32.mrf.mxu0
  %v2422 = vadd.f32 0.0, %v2421
  %v2423 = vpop.f32.mrf.mxu0
  %v2424 = vadd.f32 0.0, %v2423
  %2425 = vmatmul.bf16.gmra.mxu0 %v1997
  %v2426 = vpop.f32.mrf.mxu0
  %v2427 = vadd.f32 0.0, %v2426
  %v2428 = vpop.f32.mrf.mxu0
  %v2429 = vadd.f32 0.0, %v2428
  %2430 = vmatmul.bf16.gmra.mxu0 %v2001
  %v2431 = vpop.f32.mrf.mxu0
  %v2432 = vadd.f32 0.0, %v2431
  %v2433 = vpop.f32.mrf.mxu0
  %v2434 = vadd.f32 0.0, %v2433
  %2435 = vmatmul.bf16.gmra.mxu0 %v2005
  %v2436 = vpop.f32.mrf.mxu0
  %v2437 = vadd.f32 0.0, %v2436
  %v2438 = vpop.f32.mrf.mxu0
  %v2439 = vadd.f32 0.0, %v2438
  %2440 = vmatmul.bf16.gmra.mxu0 %v2009
  %v2441 = vpop.f32.mrf.mxu0
  %v2442 = vadd.f32 0.0, %v2441
  %v2443 = vpop.f32.mrf.mxu0
  %v2444 = vadd.f32 0.0, %v2443
  %2445 = vdwg.mxu0
  %2446 = vmatpush.bf16.msra.mxu0 %v2299
  %2447 = vmatpush.bf16.msra.mxu0 %v2297
  %2448 = vmatpush.bf16.msra.mxu0 %v2295
  %2449 = vmatpush.bf16.msra.mxu0 %v2293
  %2450 = vmatpush.bf16.msra.mxu0 %v2291
  %2451 = vmatpush.bf16.msra.mxu0 %v2289
  %2452 = vmatpush.bf16.msra.mxu0 %v2287
  %2453 = vmatpush.bf16.msra.mxu0 %v2285
  %2454 = vmatmul.bf16.gmra.mxu0 %v1982
  %v2455 = vpop.f32.mrf.mxu0
  %v2456 = vadd.f32 %v2407, %v2455
  %v2457 = vpop.f32.mrf.mxu0
  %v2458 = vadd.f32 %v2409, %v2457
  %2459 = vmatmul.bf16.gmra.mxu0 %v1986
  %v2460 = vpop.f32.mrf.mxu0
  %v2461 = vadd.f32 %v2412, %v2460
  %v2462 = vpop.f32.mrf.mxu0
  %v2463 = vadd.f32 %v2414, %v2462
  %2464 = vmatmul.bf16.gmra.mxu0 %v1990
  %v2465 = vpop.f32.mrf.mxu0
  %v2466 = vadd.f32 %v2417, %v2465
  %v2467 = vpop.f32.mrf.mxu0
  %v2468 = vadd.f32 %v2419, %v2467
  %2469 = vmatmul.bf16.gmra.mxu0 %v1994
  %v2470 = vpop.f32.mrf.mxu0
  %v2471 = vadd.f32 %v2422, %v2470
  %v2472 = vpop.f32.mrf.mxu0
  %v2473 = vadd.f32 %v2424, %v2472
  %2474 = vmatmul.bf16.gmra.mxu0 %v1998
  %v2475 = vpop.f32.mrf.mxu0
  %v2476 = vadd.f32 %v2427, %v2475
  %v2477 = vpop.f32.mrf.mxu0
  %v2478 = vadd.f32 %v2429, %v2477
  %2479 = vmatmul.bf16.gmra.mxu0 %v2002
  %v2480 = vpop.f32.mrf.mxu0
  %v2481 = vadd.f32 %v2432, %v2480
  %v2482 = vpop.f32.mrf.mxu0
  %v2483 = vadd.f32 %v2434, %v2482
  %2484 = vmatmul.bf16.gmra.mxu0 %v2006
  %v2485 = vpop.f32.mrf.mxu0
  %v2486 = vadd.f32 %v2437, %v2485
  %v2487 = vpop.f32.mrf.mxu0
  %v2488 = vadd.f32 %v2439, %v2487
  %2489 = vmatmul.bf16.gmra.mxu0 %v2010
  %v2490 = vpop.f32.mrf.mxu0
  %v2491 = vadd.f32 %v2442, %v2490
  %v2492 = vpop.f32.mrf.mxu0
  %v2493 = vadd.f32 %v2444, %v2492
  %2494 = vdwg.mxu0
  %2495 = vmatpush.bf16.msra.mxu0 %v2315
  %2496 = vmatpush.bf16.msra.mxu0 %v2313
  %2497 = vmatpush.bf16.msra.mxu0 %v2311
  %2498 = vmatpush.bf16.msra.mxu0 %v2309
  %2499 = vmatpush.bf16.msra.mxu0 %v2307
  %2500 = vmatpush.bf16.msra.mxu0 %v2305
  %2501 = vmatpush.bf16.msra.mxu0 %v2303
  %2502 = vmatpush.bf16.msra.mxu0 %v2301
  %2503 = vmatmul.bf16.gmra.mxu0 %v1983
  %v2504 = vpop.f32.mrf.mxu0
  %v2505 = vadd.f32 %v2456, %v2504
  %v2506 = vpop.f32.mrf.mxu0
  %v2507 = vadd.f32 %v2458, %v2506
  %2508 = vmatmul.bf16.gmra.mxu0 %v1987
  %v2509 = vpop.f32.mrf.mxu0
  %v2510 = vadd.f32 %v2461, %v2509
  %v2511 = vpop.f32.mrf.mxu0
  %v2512 = vadd.f32 %v2463, %v2511
  %2513 = vmatmul.bf16.gmra.mxu0 %v1991
  %v2514 = vpop.f32.mrf.mxu0
  %v2515 = vadd.f32 %v2466, %v2514
  %v2516 = vpop.f32.mrf.mxu0
  %v2517 = vadd.f32 %v2468, %v2516
  %2518 = vmatmul.bf16.gmra.mxu0 %v1995
  %v2519 = vpop.f32.mrf.mxu0
  %v2520 = vadd.f32 %v2471, %v2519
  %v2521 = vpop.f32.mrf.mxu0
  %v2522 = vadd.f32 %v2473, %v2521
  %2523 = vmatmul.bf16.gmra.mxu0 %v1999
  %v2524 = vpop.f32.mrf.mxu0
  %v2525 = vadd.f32 %v2476, %v2524
  %v2526 = vpop.f32.mrf.mxu0
  %v2527 = vadd.f32 %v2478, %v2526
  %2528 = vmatmul.bf16.gmra.mxu0 %v2003
  %v2529 = vpop.f32.mrf.mxu0
  %v2530 = vadd.f32 %v2481, %v2529
  %v2531 = vpop.f32.mrf.mxu0
  %v2532 = vadd.f32 %v2483, %v2531
  %2533 = vmatmul.bf16.gmra.mxu0 %v2007
  %v2534 = vpop.f32.mrf.mxu0
  %v2535 = vadd.f32 %v2486, %v2534
  %v2536 = vpop.f32.mrf.mxu0
  %v2537 = vadd.f32 %v2488, %v2536
  %2538 = vmatmul.bf16.gmra.mxu0 %v2011
  %v2539 = vpop.f32.mrf.mxu0
  %v2540 = vadd.f32 %v2491, %v2539
  %v2541 = vpop.f32.mrf.mxu0
  %v2542 = vadd.f32 %v2493, %v2541
  %2543 = vdwg.mxu0
  %2544 = vmatpush.bf16.msra.mxu0 %v2331
  %2545 = vmatpush.bf16.msra.mxu0 %v2329
  %2546 = vmatpush.bf16.msra.mxu0 %v2327
  %2547 = vmatpush.bf16.msra.mxu0 %v2325
  %2548 = vmatpush.bf16.msra.mxu0 %v2323
  %2549 = vmatpush.bf16.msra.mxu0 %v2321
  %2550 = vmatpush.bf16.msra.mxu0 %v2319
  %2551 = vmatpush.bf16.msra.mxu0 %v2317
  %2552 = vmatmul.bf16.gmra.mxu0 %v1984
  %v2553 = vpop.f32.mrf.mxu0
  %v2554 = vadd.f32 %v2505, %v2553
  %v2555 = vpop.f32.mrf.mxu0
  %v2556 = vadd.f32 %v2507, %v2555
  %2557 = vmatmul.bf16.gmra.mxu0 %v1988
  %v2558 = vpop.f32.mrf.mxu0
  %v2559 = vadd.f32 %v2510, %v2558
  %v2560 = vpop.f32.mrf.mxu0
  %v2561 = vadd.f32 %v2512, %v2560
  %2562 = vmatmul.bf16.gmra.mxu0 %v1992
  %v2563 = vpop.f32.mrf.mxu0
  %v2564 = vadd.f32 %v2515, %v2563
  %v2565 = vpop.f32.mrf.mxu0
  %v2566 = vadd.f32 %v2517, %v2565
  %2567 = vmatmul.bf16.gmra.mxu0 %v1996
  %v2568 = vpop.f32.mrf.mxu0
  %v2569 = vadd.f32 %v2520, %v2568
  %v2570 = vpop.f32.mrf.mxu0
  %v2571 = vadd.f32 %v2522, %v2570
  %2572 = vmatmul.bf16.gmra.mxu0 %v2000
  %v2573 = vpop.f32.mrf.mxu0
  %v2574 = vadd.f32 %v2525, %v2573
  %v2575 = vpop.f32.mrf.mxu0
  %v2576 = vadd.f32 %v2527, %v2575
  %2577 = vmatmul.bf16.gmra.mxu0 %v2004
  %v2578 = vpop.f32.mrf.mxu0
  %v2579 = vadd.f32 %v2530, %v2578
  %v2580 = vpop.f32.mrf.mxu0
  %v2581 = vadd.f32 %v2532, %v2580
  %2582 = vmatmul.bf16.gmra.mxu0 %v2008
  %v2583 = vpop.f32.mrf.mxu0
  %v2584 = vadd.f32 %v2535, %v2583
  %v2585 = vpop.f32.mrf.mxu0
  %v2586 = vadd.f32 %v2537, %v2585
  %2587 = vmatmul.bf16.gmra.mxu0 %v2012
  %v2588 = vpop.f32.mrf.mxu0
  %v2589 = vadd.f32 %v2540, %v2588
  %v2590 = vpop.f32.mrf.mxu0
  %v2591 = vadd.f32 %v2542, %v2590
  %2592 = vdwg.mxu0
  %2593 = vmatpush.bf16.msra.mxu0 %v2284
  %2594 = vmatpush.bf16.msra.mxu0 %v2282
  %2595 = vmatpush.bf16.msra.mxu0 %v2280
  %2596 = vmatpush.bf16.msra.mxu0 %v2278
  %2597 = vmatpush.bf16.msra.mxu0 %v2276
  %2598 = vmatpush.bf16.msra.mxu0 %v2274
  %2599 = vmatpush.bf16.msra.mxu0 %v2272
  %2600 = vmatpush.bf16.msra.mxu0 %v2270
  %2601 = vmatmul.bf16.gmra.mxu0 %v1981
  %v2602 = vpop.f32.mrf.mxu0
  %v2603 = vadd.f32 0.0, %v2602
  %v2604 = vpop.f32.mrf.mxu0
  %v2605 = vadd.f32 0.0, %v2604
  %2606 = vmatmul.bf16.gmra.mxu0 %v1985
  %v2607 = vpop.f32.mrf.mxu0
  %v2608 = vadd.f32 0.0, %v2607
  %v2609 = vpop.f32.mrf.mxu0
  %v2610 = vadd.f32 0.0, %v2609
  %2611 = vmatmul.bf16.gmra.mxu0 %v1989
  %v2612 = vpop.f32.mrf.mxu0
  %v2613 = vadd.f32 0.0, %v2612
  %v2614 = vpop.f32.mrf.mxu0
  %v2615 = vadd.f32 0.0, %v2614
  %2616 = vmatmul.bf16.gmra.mxu0 %v1993
  %v2617 = vpop.f32.mrf.mxu0
  %v2618 = vadd.f32 0.0, %v2617
  %v2619 = vpop.f32.mrf.mxu0
  %v2620 = vadd.f32 0.0, %v2619
  %2621 = vmatmul.bf16.gmra.mxu0 %v1997
  %v2622 = vpop.f32.mrf.mxu0
  %v2623 = vadd.f32 0.0, %v2622
  %v2624 = vpop.f32.mrf.mxu0
  %v2625 = vadd.f32 0.0, %v2624
  %2626 = vmatmul.bf16.gmra.mxu0 %v2001
  %v2627 = vpop.f32.mrf.mxu0
  %v2628 = vadd.f32 0.0, %v2627
  %v2629 = vpop.f32.mrf.mxu0
  %v2630 = vadd.f32 0.0, %v2629
  %2631 = vmatmul.bf16.gmra.mxu0 %v2005
  %v2632 = vpop.f32.mrf.mxu0
  %v2633 = vadd.f32 0.0, %v2632
  %v2634 = vpop.f32.mrf.mxu0
  %v2635 = vadd.f32 0.0, %v2634
  %2636 = vmatmul.bf16.gmra.mxu0 %v2009
  %v2637 = vpop.f32.mrf.mxu0
  %v2638 = vadd.f32 0.0, %v2637
  %v2639 = vpop.f32.mrf.mxu0
  %v2640 = vadd.f32 0.0, %v2639
  %2641 = vdwg.mxu0
  %2642 = vmatpush.bf16.msra.mxu0 %v2300
  %2643 = vmatpush.bf16.msra.mxu0 %v2298
  %2644 = vmatpush.bf16.msra.mxu0 %v2296
  %2645 = vmatpush.bf16.msra.mxu0 %v2294
  %2646 = vmatpush.bf16.msra.mxu0 %v2292
  %2647 = vmatpush.bf16.msra.mxu0 %v2290
  %2648 = vmatpush.bf16.msra.mxu0 %v2288
  %2649 = vmatpush.bf16.msra.mxu0 %v2286
  %2650 = vmatmul.bf16.gmra.mxu0 %v1982
  %v2651 = vpop.f32.mrf.mxu0
  %v2652 = vadd.f32 %v2603, %v2651
  %v2653 = vpop.f32.mrf.mxu0
  %v2654 = vadd.f32 %v2605, %v2653
  %2655 = vmatmul.bf16.gmra.mxu0 %v1986
  %v2656 = vpop.f32.mrf.mxu0
  %v2657 = vadd.f32 %v2608, %v2656
  %v2658 = vpop.f32.mrf.mxu0
  %v2659 = vadd.f32 %v2610, %v2658
  %2660 = vmatmul.bf16.gmra.mxu0 %v1990
  %v2661 = vpop.f32.mrf.mxu0
  %v2662 = vadd.f32 %v2613, %v2661
  %v2663 = vpop.f32.mrf.mxu0
  %v2664 = vadd.f32 %v2615, %v2663
  %2665 = vmatmul.bf16.gmra.mxu0 %v1994
  %v2666 = vpop.f32.mrf.mxu0
  %v2667 = vadd.f32 %v2618, %v2666
  %v2668 = vpop.f32.mrf.mxu0
  %v2669 = vadd.f32 %v2620, %v2668
  %2670 = vmatmul.bf16.gmra.mxu0 %v1998
  %v2671 = vpop.f32.mrf.mxu0
  %v2672 = vadd.f32 %v2623, %v2671
  %v2673 = vpop.f32.mrf.mxu0
  %v2674 = vadd.f32 %v2625, %v2673
  %2675 = vmatmul.bf16.gmra.mxu0 %v2002
  %v2676 = vpop.f32.mrf.mxu0
  %v2677 = vadd.f32 %v2628, %v2676
  %v2678 = vpop.f32.mrf.mxu0
  %v2679 = vadd.f32 %v2630, %v2678
  %2680 = vmatmul.bf16.gmra.mxu0 %v2006
  %v2681 = vpop.f32.mrf.mxu0
  %v2682 = vadd.f32 %v2633, %v2681
  %v2683 = vpop.f32.mrf.mxu0
  %v2684 = vadd.f32 %v2635, %v2683
  %2685 = vmatmul.bf16.gmra.mxu0 %v2010
  %v2686 = vpop.f32.mrf.mxu0
  %v2687 = vadd.f32 %v2638, %v2686
  %v2688 = vpop.f32.mrf.mxu0
  %v2689 = vadd.f32 %v2640, %v2688
  %2690 = vdwg.mxu0
  %2691 = vmatpush.bf16.msra.mxu0 %v2316
  %2692 = vmatpush.bf16.msra.mxu0 %v2314
  %2693 = vmatpush.bf16.msra.mxu0 %v2312
  %2694 = vmatpush.bf16.msra.mxu0 %v2310
  %2695 = vmatpush.bf16.msra.mxu0 %v2308
  %2696 = vmatpush.bf16.msra.mxu0 %v2306
  %2697 = vmatpush.bf16.msra.mxu0 %v2304
  %2698 = vmatpush.bf16.msra.mxu0 %v2302
  %2699 = vmatmul.bf16.gmra.mxu0 %v1983
  %v2700 = vpop.f32.mrf.mxu0
  %v2701 = vadd.f32 %v2652, %v2700
  %v2702 = vpop.f32.mrf.mxu0
  %v2703 = vadd.f32 %v2654, %v2702
  %2704 = vmatmul.bf16.gmra.mxu0 %v1987
  %v2705 = vpop.f32.mrf.mxu0
  %v2706 = vadd.f32 %v2657, %v2705
  %v2707 = vpop.f32.mrf.mxu0
  %v2708 = vadd.f32 %v2659, %v2707
  %2709 = vmatmul.bf16.gmra.mxu0 %v1991
  %v2710 = vpop.f32.mrf.mxu0
  %v2711 = vadd.f32 %v2662, %v2710
  %v2712 = vpop.f32.mrf.mxu0
  %v2713 = vadd.f32 %v2664, %v2712
  %2714 = vmatmul.bf16.gmra.mxu0 %v1995
  %v2715 = vpop.f32.mrf.mxu0
  %v2716 = vadd.f32 %v2667, %v2715
  %v2717 = vpop.f32.mrf.mxu0
  %v2718 = vadd.f32 %v2669, %v2717
  %2719 = vmatmul.bf16.gmra.mxu0 %v1999
  %v2720 = vpop.f32.mrf.mxu0
  %v2721 = vadd.f32 %v2672, %v2720
  %v2722 = vpop.f32.mrf.mxu0
  %v2723 = vadd.f32 %v2674, %v2722
  %2724 = vmatmul.bf16.gmra.mxu0 %v2003
  %v2725 = vpop.f32.mrf.mxu0
  %v2726 = vadd.f32 %v2677, %v2725
  %v2727 = vpop.f32.mrf.mxu0
  %v2728 = vadd.f32 %v2679, %v2727
  %2729 = vmatmul.bf16.gmra.mxu0 %v2007
  %v2730 = vpop.f32.mrf.mxu0
  %v2731 = vadd.f32 %v2682, %v2730
  %v2732 = vpop.f32.mrf.mxu0
  %v2733 = vadd.f32 %v2684, %v2732
  %2734 = vmatmul.bf16.gmra.mxu0 %v2011
  %v2735 = vpop.f32.mrf.mxu0
  %v2736 = vadd.f32 %v2687, %v2735
  %v2737 = vpop.f32.mrf.mxu0
  %v2738 = vadd.f32 %v2689, %v2737
  %2739 = vdwg.mxu0
  %2740 = vmatpush.bf16.msra.mxu0 %v2332
  %2741 = vmatpush.bf16.msra.mxu0 %v2330
  %2742 = vmatpush.bf16.msra.mxu0 %v2328
  %2743 = vmatpush.bf16.msra.mxu0 %v2326
  %2744 = vmatpush.bf16.msra.mxu0 %v2324
  %2745 = vmatpush.bf16.msra.mxu0 %v2322
  %2746 = vmatpush.bf16.msra.mxu0 %v2320
  %2747 = vmatpush.bf16.msra.mxu0 %v2318
  %2748 = vmatmul.bf16.gmra.mxu0 %v1984
  %v2749 = vpop.f32.mrf.mxu0
  %v2750 = vadd.f32 %v2701, %v2749
  %v2751 = vpop.f32.mrf.mxu0
  %v2752 = vadd.f32 %v2703, %v2751
  %2753 = vmatmul.bf16.gmra.mxu0 %v1988
  %v2754 = vpop.f32.mrf.mxu0
  %v2755 = vadd.f32 %v2706, %v2754
  %v2756 = vpop.f32.mrf.mxu0
  %v2757 = vadd.f32 %v2708, %v2756
  %2758 = vmatmul.bf16.gmra.mxu0 %v1992
  %v2759 = vpop.f32.mrf.mxu0
  %v2760 = vadd.f32 %v2711, %v2759
  %v2761 = vpop.f32.mrf.mxu0
  %v2762 = vadd.f32 %v2713, %v2761
  %2763 = vmatmul.bf16.gmra.mxu0 %v1996
  %v2764 = vpop.f32.mrf.mxu0
  %v2765 = vadd.f32 %v2716, %v2764
  %v2766 = vpop.f32.mrf.mxu0
  %v2767 = vadd.f32 %v2718, %v2766
  %2768 = vmatmul.bf16.gmra.mxu0 %v2000
  %v2769 = vpop.f32.mrf.mxu0
  %v2770 = vadd.f32 %v2721, %v2769
  %v2771 = vpop.f32.mrf.mxu0
  %v2772 = vadd.f32 %v2723, %v2771
  %2773 = vmatmul.bf16.gmra.mxu0 %v2004
  %v2774 = vpop.f32.mrf.mxu0
  %v2775 = vadd.f32 %v2726, %v2774
  %v2776 = vpop.f32.mrf.mxu0
  %v2777 = vadd.f32 %v2728, %v2776
  %2778 = vmatmul.bf16.gmra.mxu0 %v2008
  %v2779 = vpop.f32.mrf.mxu0
  %v2780 = vadd.f32 %v2731, %v2779
  %v2781 = vpop.f32.mrf.mxu0
  %v2782 = vadd.f32 %v2733, %v2781
  %2783 = vmatmul.bf16.gmra.mxu0 %v2012
  %v2784 = vpop.f32.mrf.mxu0
  %v2785 = vadd.f32 %v2736, %v2784
  %v2786 = vpop.f32.mrf.mxu0
  %v2787 = vadd.f32 %v2738, %v2786
  %2788 = vdwg.mxu0
  %v2789 = vtanh.pop %v2554
  %v2790 = vtanh.pop %v2750
  %v2791 = vtanh.pop %v2556
  %v2792 = vtanh.pop %v2752
  %v2793 = vtanh.pop %v2559
  %v2794 = vtanh.pop %v2755
  %v2795 = vtanh.pop %v2561
  %v2796 = vtanh.pop %v2757
  %v2797 = vtanh.pop %v2564
  %v2798 = vtanh.pop %v2760
  %v2799 = vtanh.pop %v2566
  %v2800 = vtanh.pop %v2762
  %v2801 = vtanh.pop %v2569
  %v2802 = vtanh.pop %v2765
  %v2803 = vtanh.pop %v2571
  %v2804 = vtanh.pop %v2767
  %v2805 = vtanh.pop %v2574
  %v2806 = vtanh.pop %v2770
  %v2807 = vtanh.pop %v2576
  %v2808 = vtanh.pop %v2772
  %v2809 = vtanh.pop %v2579
  %v2810 = vtanh.pop %v2775
  %v2811 = vtanh.pop %v2581
  %v2812 = vtanh.pop %v2777
  %v2813 = vtanh.pop %v2584
  %v2814 = vtanh.pop %v2780
  %v2815 = vtanh.pop %v2586
  %v2816 = vtanh.pop %v2782
  %v2817 = vtanh.pop %v2589
  %v2818 = vtanh.pop %v2785
  %v2819 = vtanh.pop %v2591
  %v2820 = vtanh.pop %v2787
  %2821 = vst [vmem:[%s8] sm:$0xff] %v2789
  %2822 = vst [vmem:[%s8 + $0x8] sm:$0xff] %v2790
  %2823 = vst [vmem:[%s8 + $0x10] sm:$0xff] %v2791
  %2824 = vst [vmem:[%s8 + $0x18] sm:$0xff] %v2792
  %2825 = vst [vmem:[%s8 + $0x20] sm:$0xff] %v2793
  %2826 = vst [vmem:[%s8 + $0x28] sm:$0xff] %v2794
  %2827 = vst [vmem:[%s8 + $0x30] sm:$0xff] %v2795
  %2828 = vst [vmem:[%s8 + $0x38] sm:$0xff] %v2796
  %2829 = vst [vmem:[%s8 + $0x40] sm:$0xff] %v2797
  %2830 = vst [vmem:[%s8 + $0x48] sm:$0xff] %v2798
  %2831 = vst [vmem:[%s8 + $0x50] sm:$0xff] %v2799
  %2832 = vst [vmem:[%s8 + $0x58] sm:$0xff] %v2800
  %2833 = vst [vmem:[%s8 + $0x60] sm:$0xff] %v2801
  %2834 = vst [vmem:[%s8 + $0x68] sm:$0xff] %v2802
  %2835 = vst [vmem:[%s8 + $0x70] sm:$0xff] %v2803
  %2836 = vst [vmem:[%s8 + $0x78] sm:$0xff] %v2804
  %2837 = vst [vmem:[%s8 + $0x80] sm:$0xff] %v2805
  %2838 = vst [vmem:[%s8 + $0x88] sm:$0xff] %v2806
  %2839 = vst [vmem:[%s8 + $0x90] sm:$0xff] %v2807
  %2840 = vst [vmem:[%s8 + $0x98] sm:$0xff] %v2808
  %2841 = vst [vmem:[%s8 + $0xa0] sm:$0xff] %v2809
  %2842 = vst [vmem:[%s8 + $0xa8] sm:$0xff] %v2810
  %2843 = vst [vmem:[%s8 + $0xb0] sm:$0xff] %v2811
  %2844 = vst [vmem:[%s8 + $0xb8] sm:$0xff] %v2812
  %2845 = vst [vmem:[%s8 + $0xc0] sm:$0xff] %v2813
  %2846 = vst [vmem:[%s8 + $0xc8] sm:$0xff] %v2814
  %2847 = vst [vmem:[%s8 + $0xd0] sm:$0xff] %v2815
  %2848 = vst [vmem:[%s8 + $0xd8] sm:$0xff] %v2816
  %2849 = vst [vmem:[%s8 + $0xe0] sm:$0xff] %v2817
  %2850 = vst [vmem:[%s8 + $0xe8] sm:$0xff] %v2818
  %2851 = vst [vmem:[%s8 + $0xf0] sm:$0xff] %v2819
  %2852 = vst [vmem:[%s8 + $0xf8] sm:$0xff] %v2820
  // Predicated region
  $region34: #{netg_forward.1} parent=0 // pred_check
    _
  $region35: #{netg_forward.1} parent=0 // pred_check_branch
    %2854 = sbr.rel (0) target = $region37
  $region36: #{netg_forward.1} parent=0 // pred_region
    _
  $region37: #{netg_forward.1} parent=0 // pred_fallthru
    _
  // Predicated region
  $region38: #{netg_forward.1} parent=0 // pred_check
    _
  $region39: #{netg_forward.1} parent=0 // pred_check_branch
    %2856 = sbr.rel (0) target = $region41
  $region40: #{netg_forward.1} parent=0 // pred_region
    _
  $region41: #{netg_forward.1} parent=0 // pred_fallthru
    _
  %2857 = vsyncmov [#allocation4]
  %s2858 = vpop.sfrf %2857
  %p2859 = scmp.eq.s32.totalorder %s2858, 0
  %p2860 = pneg %p2859
  %2862 = shalt.err (%p2860)
  %s2863 = scalar_lea.sflag [#allocation4], 1
  %2864 = vsyncmov %s2863
  %s2865 = vpop.sfrf %2864
  %p2866 = scmp.eq.s32.totalorder %s2865, 0
  %p2867 = pneg %p2866
  %2869 = shalt.err (%p2867)

</llo_original>
